<compile_context>
chip_gen: v5e
topology: v5e:2x2
jax: 0.10.0
libtpu: 0.0.40
codegen_flags: <defaults>
</compile_context>

<pallas_src>
import functools

import jax
import jax.numpy as jnp
from jax.experimental import pallas as pl
from jax.experimental.pallas import tpu as pltpu

_LANE = 128      # vreg lane width (last dim)
_SUBLANE = 8     # vreg sublane count (second-to-last dim)


def _round_up(x, m):
    return (x + m - 1) // m * m


def _vmem_capacity_bytes():
    """Physical per-core VMEM, with a conservative fallback (safe on v5e/v6e/v7x)."""
    try:
        info = pltpu.get_tpu_info()
        cap = getattr(info, "vmem_capacity_bytes", None)
        if cap:
            return int(cap)
    except Exception:
        pass
    return 64 * 1024 * 1024


def _pad_params(weights, biases, dtype):
    """One-time lane-dense (multiple-of-128) zero padding of weights/biases."""
    dims = [weights[0].shape[0]] + [w.shape[1] for w in weights]
    dims_pad = [_round_up(d, _LANE) for d in dims]
    w_padded, b_padded = [], []
    for i, (w, b) in enumerate(zip(weights, biases)):
        wp = jnp.zeros((dims_pad[i], dims_pad[i + 1]), dtype)
        wp = wp.at[: w.shape[0], : w.shape[1]].set(w.astype(dtype))
        bp = jnp.zeros((1, dims_pad[i + 1]), dtype)
        bp = bp.at[0, : b.shape[0]].set(b.astype(dtype))
        w_padded.append(wp)
        b_padded.append(bp)
    return w_padded, b_padded


def _fused_linears_kernel(*refs, num_layers, store_layers):
    """Fused stack of (h @ W_i + b_i), relu between layers; selected outputs stored.

    refs layout:
      refs[0]                    : x tile       (tm, K0_pad)
      refs[1 + 2*i]              : W_i          (Kin_i_pad, Kout_i_pad)
      refs[2 + 2*i]              : b_i          (1, Kout_i_pad)
      refs[1 + 2*num_layers + j] : out tile for the j-th stored layer (tm, Kout_pad)
    """
    x_ref = refs[0]
    w_refs = [refs[1 + 2 * i] for i in range(num_layers)]
    b_refs = [refs[2 + 2 * i] for i in range(num_layers)]
    out_refs = refs[1 + 2 * num_layers:]

    compute_dtype = x_ref.dtype
    h = x_ref[...]
    out_idx = 0
    for i in range(num_layers):
        y = jnp.dot(h, w_refs[i][...], preferred_element_type=jnp.float32)
        y = y + b_refs[i][...].astype(jnp.float32)
        if i < num_layers - 1:
            y = jnp.maximum(y, 0.0)          # relu (dropout_prob=0.0 -> identity)
        if i in store_layers:
            out_refs[out_idx][...] = y.astype(out_refs[out_idx].dtype)
            out_idx += 1
        h = y.astype(compute_dtype)


def linears_fused(x2d, w_padded, b_padded, dims, *, return_all_layers=True,
                  out_dtype=None, max_tm=512):
    """Run the fused linear stack on TPU.

    x2d: (M, dims[0]).  w_padded/b_padded: pre-padded (lane-dense) params; their dtype is
    the compute dtype (f32 or bf16).  dims: un-padded layer widths.  Returns the list of
    per-layer outputs (all layers, or only the final one if return_all_layers=False),
    each (M, dims[i+1]) in out_dtype.
    """
    num_layers = len(w_padded)
    M, K0 = x2d.shape
    assert K0 == dims[0]
    compute_dtype = w_padded[0].dtype
    out_dtype = out_dtype if out_dtype is not None else x2d.dtype
    itemsize = jnp.dtype(compute_dtype).itemsize
    out_itemsize = jnp.dtype(out_dtype).itemsize

    dims_pad = [w_padded[0].shape[0]] + [w.shape[1] for w in w_padded]
    store_layers = tuple(range(num_layers)) if return_all_layers else (num_layers - 1,)
    store_dims_pad = [dims_pad[i + 1] for i in store_layers]

    # Pad rows only to a multiple of 8 sublanes (not to a multiple of tm).
    M_pad = _round_up(max(M, _SUBLANE), _SUBLANE)
    if M_pad == M and dims_pad[0] == K0 and x2d.dtype == compute_dtype:
        x_p = x2d
    else:
        x_p = jnp.zeros((M_pad, dims_pad[0]), compute_dtype)
        x_p = x_p.at[:M, :K0].set(x2d.astype(compute_dtype))

    # ---- VMEM-aware tile sizing -------------------------------------------------------
    vmem_cap = _vmem_capacity_bytes()
    vmem_limit = int(min(vmem_cap * 0.9, 100 * 1024 * 1024))
    vmem_budget = int(vmem_limit * 0.8)

    param_bytes = sum(int(w.size) * w.dtype.itemsize + int(b.size) * b.dtype.itemsize
                      for w, b in zip(w_padded, b_padded))
    max_dim_pad = max(dims_pad)

    def vmem_bytes(tm_, buffered_params=True):
        x_buf = 2 * tm_ * dims_pad[0] * itemsize                      # x (double-buffered)
        out_buf = sum(2 * tm_ * d * out_itemsize for d in store_dims_pad)
        params = param_bytes * (1 if buffered_params else 2)          # Buffered(1) -> 1x
        live = 3 * tm_ * max_dim_pad * 4                              # in-kernel h/y temps (f32)
        return x_buf + out_buf + params + live + (2 << 20)            # + compiler scratch headroom

    tm = min(_round_up(max_tm, _SUBLANE), M_pad)
    while tm > _SUBLANE and vmem_bytes(tm) > vmem_budget:
        tm -= _SUBLANE
    tm = max(tm, _SUBLANE)

    # Give both v7x TensorCores work (harmless on 1-TC chips: ~0.35 us extra per step).
    if pl.cdiv(M_pad, tm) < 2 and M_pad > _SUBLANE:
        tm = _round_up(pl.cdiv(M_pad, 2), _SUBLANE)

    grid = (pl.cdiv(M_pad, tm),)

    # ---- Specs / shapes ----------------------------------------------------------------
    out_shapes = tuple(jax.ShapeDtypeStruct((M_pad, dims_pad[i + 1]), out_dtype)
                       for i in store_layers)

    flops = int(sum(2 * M_pad * dims_pad[i] * dims_pad[i + 1] for i in range(num_layers)))
    bytes_accessed = int(int(x_p.size) * itemsize + param_bytes
                         + sum(M_pad * d * out_itemsize for d in store_dims_pad))

    kernel = functools.partial(_fused_linears_kernel,
                               num_layers=num_layers, store_layers=store_layers)
    flat_params = [t for pair in zip(w_padded, b_padded) for t in pair]

    def build_call(use_buffered):
        in_specs = [pl.BlockSpec((tm, dims_pad[0]), lambda i: (i, 0))]
        for li in range(num_layers):
            w_shape = (dims_pad[li], dims_pad[li + 1])
            b_shape = (1, dims_pad[li + 1])
            if use_buffered:
                in_specs.append(pl.BlockSpec(w_shape, lambda i: (0, 0),
                                             pipeline_mode=pl.Buffered(1)))
                in_specs.append(pl.BlockSpec(b_shape, lambda i: (0, 0),
                                             pipeline_mode=pl.Buffered(1)))
            else:
                in_specs.append(pl.BlockSpec(w_shape, lambda i: (0, 0)))
                in_specs.append(pl.BlockSpec(b_shape, lambda i: (0, 0)))
        out_specs = tuple(pl.BlockSpec((tm, dims_pad[i + 1]), lambda g: (g, 0))
                          for i in store_layers)
        return pl.pallas_call(
            kernel,
            out_shape=out_shapes,
            grid_spec=pl.GridSpec(grid=grid, in_specs=in_specs, out_specs=out_specs),
            compiler_params=pltpu.CompilerParams(
                dimension_semantics=("parallel",),
                vmem_limit_bytes=vmem_limit,
            ),
            cost_estimate=pl.CostEstimate(
                flops=flops, transcendentals=0, bytes_accessed=bytes_accessed),
        )

    try:
        outs_padded = build_call(True)(x_p, *flat_params)
    except Exception:
        # Fallback if pipeline_mode=pl.Buffered(1) is not supported by this jax version.
        outs_padded = build_call(False)(x_p, *flat_params)

    # Strip row / lane padding.
    return [outs_padded[j][:M, :dims[li + 1]] for j, li in enumerate(store_layers)]


class LinearsPallas:
    """Multiple linear layers with (relu + dropout) between layers, Pallas-backed."""

    def __init__(self, dimensions, key, dropout_prob=0.0, bias=True):
        assert len(dimensions) > 1
        self.num_layer = len(dimensions) - 1
        self.dims = list(dimensions)
        self.dropout_prob = dropout_prob  # 0.0 / eval -> identity
        self.params = []
        for i in range(self.num_layer):
            key, kw, kb = jax.random.split(key, 3)
            fan_in, fan_out = dimensions[i], dimensions[i + 1]
            bound = 1.0 / jnp.sqrt(fan_in)
            w = jax.random.uniform(kw, (fan_in, fan_out), jnp.float32, -bound, bound)
            if bias:
                b = jax.random.uniform(kb, (fan_out,), jnp.float32, -bound, bound)
            else:
                b = jnp.zeros((fan_out,), jnp.float32)
            self.params.append((w, b))
        self._padded_cache = {}   # compute-dtype name -> (w_padded, b_padded), padded ONCE

    def _padded(self, compute_dtype):
        key = jnp.dtype(compute_dtype).name
        if key not in self._padded_cache:
            weights = [w for (w, _) in self.params]
            biases = [b for (_, b) in self.params]
            self._padded_cache[key] = _pad_params(weights, biases, compute_dtype)
        return self._padded_cache[key]

    def __call__(self, inputs, *, return_all_layers=True, compute_dtype=jnp.float32):
        # inputs: (batch, seq, in_dim)
        batch, seq, _ = inputs.shape
        x = inputs.reshape(batch * seq, -1)
        w_padded, b_padded = self._padded(compute_dtype)
        outs2d = linears_fused(x, w_padded, b_padded, self.dims,
                               return_all_layers=return_all_layers,
                               out_dtype=inputs.dtype)
        return [o.reshape(batch, seq, -1) for o in outs2d]


def _reference(inputs, params, num_layer):
    x = inputs
    outs = []
    for i, (w, b) in enumerate(params):
        x = jnp.einsum("bsk,kn->bsn", x, w) + b
        if i < num_layer - 1:
            x = jnp.maximum(x, 0.0)
        outs.append(x)
    return outs


if __name__ == "__main__":
    key = jax.random.PRNGKey(0)
    k_in, k_params = jax.random.split(key)

    batch, seq = 2, 8
    dimensions = [32, 64, 48, 16]

    model = LinearsPallas(dimensions, k_params)
    x = jax.random.normal(k_in, (batch, seq, dimensions[0]), jnp.float32)
    refs = _reference(x, model.params, model.num_layer)

    # 1) f32 compute, all per-layer outputs (matches the PyTorch forward exactly).
    outs = model(x)
    outs = [jax.block_until_ready(o) for o in outs]
    for o, r in zip(outs, refs):
        assert o.shape == r.shape
        assert jnp.allclose(o, r, atol=1e-4, rtol=1e-4), "f32 mismatch vs reference"

    # 2) Final-layer-only path (skips intermediate HBM writeback).
    final_only = model(x, return_all_layers=False)
    final_only = [jax.block_until_ready(o) for o in final_only]
    assert len(final_only) == 1
    assert jnp.allclose(final_only[0], refs[-1], atol=1e-4, rtol=1e-4), "final-only mismatch"

    # 3) bf16 compute (recommended on v6e/v7x), f32 accumulation and f32 store.
    outs_bf16 = model(x, compute_dtype=jnp.bfloat16)
    outs_bf16 = [jax.block_until_ready(o) for o in outs_bf16]
    for o, r in zip(outs_bf16, refs):
        assert o.shape == r.shape
        assert jnp.allclose(o, r, atol=1e-1, rtol=1e-1), "bf16 mismatch vs reference"

    print("KERNEL_OK")
</pallas_src>

<mosaic_0001>
module attributes {stable_mosaic.version = 11 : i64} {
  func.func @_fused_linears_kernel(%arg0: i32, %arg1: memref<8x128xf32, #tpu.memory_space<vmem>>, %arg2: memref<128x128xf32, #tpu.memory_space<vmem>>, %arg3: memref<1x128xf32, #tpu.memory_space<vmem>>, %arg4: memref<128x128xf32, #tpu.memory_space<vmem>>, %arg5: memref<1x128xf32, #tpu.memory_space<vmem>>, %arg6: memref<128x128xf32, #tpu.memory_space<vmem>>, %arg7: memref<1x128xf32, #tpu.memory_space<vmem>>, %arg8: memref<8x128xf32, #tpu.memory_space<vmem>>, %arg9: memref<8x128xf32, #tpu.memory_space<vmem>>, %arg10: memref<8x128xf32, #tpu.memory_space<vmem>>) attributes {dimension_semantics = [#tpu.dimension_semantics<parallel>], iteration_bounds = array<i64: 2>, scalar_prefetch = 0 : i64, scratch_operands = 0 : i64, tpu.core_type = #tpu.core_type<tc>, window_params = [{transform_indices = @transform_0, window_bounds = array<i64: 8, 128>}, {pipeline_mode = #tpu.pipeline_mode<synchronous>, transform_indices = @transform_1, window_bounds = array<i64: 128, 128>}, {pipeline_mode = #tpu.pipeline_mode<synchronous>, transform_indices = @transform_2, window_bounds = array<i64: 1, 128>}, {pipeline_mode = #tpu.pipeline_mode<synchronous>, transform_indices = @transform_3, window_bounds = array<i64: 128, 128>}, {pipeline_mode = #tpu.pipeline_mode<synchronous>, transform_indices = @transform_4, window_bounds = array<i64: 1, 128>}, {pipeline_mode = #tpu.pipeline_mode<synchronous>, transform_indices = @transform_5, window_bounds = array<i64: 128, 128>}, {pipeline_mode = #tpu.pipeline_mode<synchronous>, transform_indices = @transform_6, window_bounds = array<i64: 1, 128>}, {transform_indices = @transform_7, window_bounds = array<i64: 8, 128>}, {transform_indices = @transform_8, window_bounds = array<i64: 8, 128>}, {transform_indices = @transform_9, window_bounds = array<i64: 8, 128>}]} {
    %c0 = arith.constant 0 : index
    %c0_0 = arith.constant 0 : index
    %0 = vector.load %arg1[%c0, %c0_0] : memref<8x128xf32, #tpu.memory_space<vmem>>, vector<8x128xf32>
    %c0_1 = arith.constant 0 : index
    %c0_2 = arith.constant 0 : index
    %1 = vector.load %arg2[%c0_1, %c0_2] : memref<128x128xf32, #tpu.memory_space<vmem>>, vector<128x128xf32>
    %cst = arith.constant dense<0.000000e+00> : vector<8x128xf32>
    %2 = tpu.matmul %0, %1, %cst {dimension_numbers = #tpu.dot_dimension_numbers<[1], [0], [0], [1], [0, 0, 1, 1], [], []>} : vector<8x128xf32>, vector<128x128xf32>, vector<8x128xf32> -> vector<8x128xf32>
    %c0_3 = arith.constant 0 : index
    %c0_4 = arith.constant 0 : index
    %3 = vector.load %arg3[%c0_3, %c0_4] : memref<1x128xf32, #tpu.memory_space<vmem>>, vector<1x128xf32>
    %4 = vector.broadcast %3 : vector<1x128xf32> to vector<8x128xf32>
    %5 = arith.addf %2, %4 : vector<8x128xf32>
    %cst_5 = arith.constant 0.000000e+00 : f32
    %6 = vector.broadcast %cst_5 : f32 to vector<8x128xf32>
    %7 = arith.maximumf %5, %6 : vector<8x128xf32>
    %c0_6 = arith.constant 0 : index
    %c0_7 = arith.constant 0 : index
    %8 = vector.load %arg8[%c0_6, %c0_7] : memref<8x128xf32, #tpu.memory_space<vmem>>, vector<8x128xf32>
    tpu.vector_store %arg8[%c0_6, %c0_7], %7 {strides = array<i32>} : memref<8x128xf32, #tpu.memory_space<vmem>>, vector<8x128xf32>,
    %c0_8 = arith.constant 0 : index
    %c0_9 = arith.constant 0 : index
    %9 = vector.load %arg4[%c0_8, %c0_9] : memref<128x128xf32, #tpu.memory_space<vmem>>, vector<128x128xf32>
    %cst_10 = arith.constant dense<0.000000e+00> : vector<8x128xf32>
    %10 = tpu.matmul %7, %9, %cst_10 {dimension_numbers = #tpu.dot_dimension_numbers<[1], [0], [0], [1], [0, 0, 1, 1], [], []>} : vector<8x128xf32>, vector<128x128xf32>, vector<8x128xf32> -> vector<8x128xf32>
    %c0_11 = arith.constant 0 : index
    %c0_12 = arith.constant 0 : index
    %11 = vector.load %arg5[%c0_11, %c0_12] : memref<1x128xf32, #tpu.memory_space<vmem>>, vector<1x128xf32>
    %12 = vector.broadcast %11 : vector<1x128xf32> to vector<8x128xf32>
    %13 = arith.addf %10, %12 : vector<8x128xf32>
    %cst_13 = arith.constant 0.000000e+00 : f32
    %14 = vector.broadcast %cst_13 : f32 to vector<8x128xf32>
    %15 = arith.maximumf %13, %14 : vector<8x128xf32>
    %c0_14 = arith.constant 0 : index
    %c0_15 = arith.constant 0 : index
    %16 = vector.load %arg9[%c0_14, %c0_15] : memref<8x128xf32, #tpu.memory_space<vmem>>, vector<8x128xf32>
    tpu.vector_store %arg9[%c0_14, %c0_15], %15 {strides = array<i32>} : memref<8x128xf32, #tpu.memory_space<vmem>>, vector<8x128xf32>,
    %c0_16 = arith.constant 0 : index
    %c0_17 = arith.constant 0 : index
    %17 = vector.load %arg6[%c0_16, %c0_17] : memref<128x128xf32, #tpu.memory_space<vmem>>, vector<128x128xf32>
    %cst_18 = arith.constant dense<0.000000e+00> : vector<8x128xf32>
    %18 = tpu.matmul %15, %17, %cst_18 {dimension_numbers = #tpu.dot_dimension_numbers<[1], [0], [0], [1], [0, 0, 1, 1], [], []>} : vector<8x128xf32>, vector<128x128xf32>, vector<8x128xf32> -> vector<8x128xf32>
    %c0_19 = arith.constant 0 : index
    %c0_20 = arith.constant 0 : index
    %19 = vector.load %arg7[%c0_19, %c0_20] : memref<1x128xf32, #tpu.memory_space<vmem>>, vector<1x128xf32>
    %20 = vector.broadcast %19 : vector<1x128xf32> to vector<8x128xf32>
    %21 = arith.addf %18, %20 : vector<8x128xf32>
    %c0_21 = arith.constant 0 : index
    %c0_22 = arith.constant 0 : index
    %22 = vector.load %arg10[%c0_21, %c0_22] : memref<8x128xf32, #tpu.memory_space<vmem>>, vector<8x128xf32>
    tpu.vector_store %arg10[%c0_21, %c0_22], %21 {strides = array<i32>} : memref<8x128xf32, #tpu.memory_space<vmem>>, vector<8x128xf32>,
    return
  }
  func.func @transform_0(%arg0: i32) -> (i32, i32) {
    %c0_i32 = arith.constant 0 : i32
    %c0_i32_0 = arith.constant 0 : i32
    return %arg0, %c0_i32 : i32, i32
  }
  func.func @transform_1(%arg0: i32) -> (i32, i32) {
    %c0_i32 = arith.constant 0 : i32
    %c0_i32_0 = arith.constant 0 : i32
    %c0_i32_1 = arith.constant 0 : i32
    return %c0_i32, %c0_i32_0 : i32, i32
  }
  func.func @transform_2(%arg0: i32) -> (i32, i32) {
    %c0_i32 = arith.constant 0 : i32
    %c0_i32_0 = arith.constant 0 : i32
    %c0_i32_1 = arith.constant 0 : i32
    return %c0_i32, %c0_i32_0 : i32, i32
  }
  func.func @transform_3(%arg0: i32) -> (i32, i32) {
    %c0_i32 = arith.constant 0 : i32
    %c0_i32_0 = arith.constant 0 : i32
    %c0_i32_1 = arith.constant 0 : i32
    return %c0_i32, %c0_i32_0 : i32, i32
  }
  func.func @transform_4(%arg0: i32) -> (i32, i32) {
    %c0_i32 = arith.constant 0 : i32
    %c0_i32_0 = arith.constant 0 : i32
    %c0_i32_1 = arith.constant 0 : i32
    return %c0_i32, %c0_i32_0 : i32, i32
  }
  func.func @transform_5(%arg0: i32) -> (i32, i32) {
    %c0_i32 = arith.constant 0 : i32
    %c0_i32_0 = arith.constant 0 : i32
    %c0_i32_1 = arith.constant 0 : i32
    return %c0_i32, %c0_i32_0 : i32, i32
  }
  func.func @transform_6(%arg0: i32) -> (i32, i32) {
    %c0_i32 = arith.constant 0 : i32
    %c0_i32_0 = arith.constant 0 : i32
    %c0_i32_1 = arith.constant 0 : i32
    return %c0_i32, %c0_i32_0 : i32, i32
  }
  func.func @transform_7(%arg0: i32) -> (i32, i32) {
    %c0_i32 = arith.constant 0 : i32
    %c0_i32_0 = arith.constant 0 : i32
    return %arg0, %c0_i32 : i32, i32
  }
  func.func @transform_8(%arg0: i32) -> (i32, i32) {
    %c0_i32 = arith.constant 0 : i32
    %c0_i32_0 = arith.constant 0 : i32
    return %arg0, %c0_i32 : i32, i32
  }
  func.func @transform_9(%arg0: i32) -> (i32, i32) {
    %c0_i32 = arith.constant 0 : i32
    %c0_i32_0 = arith.constant 0 : i32
    return %arg0, %c0_i32 : i32, i32
  }
}

module attributes {stable_mosaic.version = 11 : i64} {
  func.func @_fused_linears_kernel(%arg0: i32, %arg1: memref<8x128xf32, #tpu.memory_space<vmem>>, %arg2: memref<128x128xf32, #tpu.memory_space<vmem>>, %arg3: memref<1x128xf32, #tpu.memory_space<vmem>>, %arg4: memref<128x128xf32, #tpu.memory_space<vmem>>, %arg5: memref<1x128xf32, #tpu.memory_space<vmem>>, %arg6: memref<128x128xf32, #tpu.memory_space<vmem>>, %arg7: memref<1x128xf32, #tpu.memory_space<vmem>>, %arg8: memref<8x128xf32, #tpu.memory_space<vmem>>, %arg9: memref<8x128xf32, #tpu.memory_space<vmem>>, %arg10: memref<8x128xf32, #tpu.memory_space<vmem>>) attributes {dimension_semantics = [#tpu.dimension_semantics<parallel>], iteration_bounds = array<i64: 2>, scalar_prefetch = 0 : i64, scratch_operands = 0 : i64, tpu.core_type = #tpu.core_type<tc>, window_params = [{transform_indices = @transform_0, window_bounds = array<i64: 8, 128>}, {pipeline_mode = #tpu.pipeline_mode<synchronous>, transform_indices = @transform_1, window_bounds = array<i64: 128, 128>}, {pipeline_mode = #tpu.pipeline_mode<synchronous>, transform_indices = @transform_2, window_bounds = array<i64: 1, 128>}, {pipeline_mode = #tpu.pipeline_mode<synchronous>, transform_indices = @transform_3, window_bounds = array<i64: 128, 128>}, {pipeline_mode = #tpu.pipeline_mode<synchronous>, transform_indices = @transform_4, window_bounds = array<i64: 1, 128>}, {pipeline_mode = #tpu.pipeline_mode<synchronous>, transform_indices = @transform_5, window_bounds = array<i64: 128, 128>}, {pipeline_mode = #tpu.pipeline_mode<synchronous>, transform_indices = @transform_6, window_bounds = array<i64: 1, 128>}, {transform_indices = @transform_7, window_bounds = array<i64: 8, 128>}, {transform_indices = @transform_8, window_bounds = array<i64: 8, 128>}, {transform_indices = @transform_9, window_bounds = array<i64: 8, 128>}]} {
    %c0 = arith.constant 0 : index
    %c0_0 = arith.constant 0 : index
    %0 = vector.load %arg1[%c0, %c0_0] : memref<8x128xf32, #tpu.memory_space<vmem>>, vector<8x128xf32>
    %c0_1 = arith.constant 0 : index
    %c0_2 = arith.constant 0 : index
    %1 = vector.load %arg2[%c0_1, %c0_2] : memref<128x128xf32, #tpu.memory_space<vmem>>, vector<128x128xf32>
    %cst = arith.constant dense<0.000000e+00> : vector<8x128xf32>
    %2 = tpu.matmul %0, %1, %cst {dimension_numbers = #tpu.dot_dimension_numbers<[1], [0], [0], [1], [0, 0, 1, 1], [], []>} : vector<8x128xf32>, vector<128x128xf32>, vector<8x128xf32> -> vector<8x128xf32>
    %c0_3 = arith.constant 0 : index
    %c0_4 = arith.constant 0 : index
    %3 = vector.load %arg3[%c0_3, %c0_4] : memref<1x128xf32, #tpu.memory_space<vmem>>, vector<1x128xf32>
    %4 = vector.broadcast %3 : vector<1x128xf32> to vector<8x128xf32>
    %5 = arith.addf %2, %4 : vector<8x128xf32>
    %cst_5 = arith.constant 0.000000e+00 : f32
    %6 = vector.broadcast %cst_5 : f32 to vector<8x128xf32>
    %7 = arith.maximumf %5, %6 : vector<8x128xf32>
    %c0_6 = arith.constant 0 : index
    %c0_7 = arith.constant 0 : index
    %8 = vector.load %arg8[%c0_6, %c0_7] : memref<8x128xf32, #tpu.memory_space<vmem>>, vector<8x128xf32>
    tpu.vector_store %arg8[%c0_6, %c0_7], %7 {strides = array<i32>} : memref<8x128xf32, #tpu.memory_space<vmem>>, vector<8x128xf32>,
    %c0_8 = arith.constant 0 : index
    %c0_9 = arith.constant 0 : index
    %9 = vector.load %arg4[%c0_8, %c0_9] : memref<128x128xf32, #tpu.memory_space<vmem>>, vector<128x128xf32>
    %cst_10 = arith.constant dense<0.000000e+00> : vector<8x128xf32>
    %10 = tpu.matmul %7, %9, %cst_10 {dimension_numbers = #tpu.dot_dimension_numbers<[1], [0], [0], [1], [0, 0, 1, 1], [], []>} : vector<8x128xf32>, vector<128x128xf32>, vector<8x128xf32> -> vector<8x128xf32>
    %c0_11 = arith.constant 0 : index
    %c0_12 = arith.constant 0 : index
    %11 = vector.load %arg5[%c0_11, %c0_12] : memref<1x128xf32, #tpu.memory_space<vmem>>, vector<1x128xf32>
    %12 = vector.broadcast %11 : vector<1x128xf32> to vector<8x128xf32>
    %13 = arith.addf %10, %12 : vector<8x128xf32>
    %cst_13 = arith.constant 0.000000e+00 : f32
    %14 = vector.broadcast %cst_13 : f32 to vector<8x128xf32>
    %15 = arith.maximumf %13, %14 : vector<8x128xf32>
    %c0_14 = arith.constant 0 : index
    %c0_15 = arith.constant 0 : index
    %16 = vector.load %arg9[%c0_14, %c0_15] : memref<8x128xf32, #tpu.memory_space<vmem>>, vector<8x128xf32>
    tpu.vector_store %arg9[%c0_14, %c0_15], %15 {strides = array<i32>} : memref<8x128xf32, #tpu.memory_space<vmem>>, vector<8x128xf32>,
    %c0_16 = arith.constant 0 : index
    %c0_17 = arith.constant 0 : index
    %17 = vector.load %arg6[%c0_16, %c0_17] : memref<128x128xf32, #tpu.memory_space<vmem>>, vector<128x128xf32>
    %cst_18 = arith.constant dense<0.000000e+00> : vector<8x128xf32>
    %18 = tpu.matmul %15, %17, %cst_18 {dimension_numbers = #tpu.dot_dimension_numbers<[1], [0], [0], [1], [0, 0, 1, 1], [], []>} : vector<8x128xf32>, vector<128x128xf32>, vector<8x128xf32> -> vector<8x128xf32>
    %c0_19 = arith.constant 0 : index
    %c0_20 = arith.constant 0 : index
    %19 = vector.load %arg7[%c0_19, %c0_20] : memref<1x128xf32, #tpu.memory_space<vmem>>, vector<1x128xf32>
    %20 = vector.broadcast %19 : vector<1x128xf32> to vector<8x128xf32>
    %21 = arith.addf %18, %20 : vector<8x128xf32>
    %c0_21 = arith.constant 0 : index
    %c0_22 = arith.constant 0 : index
    %22 = vector.load %arg10[%c0_21, %c0_22] : memref<8x128xf32, #tpu.memory_space<vmem>>, vector<8x128xf32>
    tpu.vector_store %arg10[%c0_21, %c0_22], %21 {strides = array<i32>} : memref<8x128xf32, #tpu.memory_space<vmem>>, vector<8x128xf32>,
    return
  }
  func.func @transform_0(%arg0: i32) -> (i32, i32) {
    %c0_i32 = arith.constant 0 : i32
    %c0_i32_0 = arith.constant 0 : i32
    return %arg0, %c0_i32 : i32, i32
  }
  func.func @transform_1(%arg0: i32) -> (i32, i32) {
    %c0_i32 = arith.constant 0 : i32
    %c0_i32_0 = arith.constant 0 : i32
    %c0_i32_1 = arith.constant 0 : i32
    return %c0_i32, %c0_i32_0 : i32, i32
  }
  func.func @transform_2(%arg0: i32) -> (i32, i32) {
    %c0_i32 = arith.constant 0 : i32
    %c0_i32_0 = arith.constant 0 : i32
    %c0_i32_1 = arith.constant 0 : i32
    return %c0_i32, %c0_i32_0 : i32, i32
  }
  func.func @transform_3(%arg0: i32) -> (i32, i32) {
    %c0_i32 = arith.constant 0 : i32
    %c0_i32_0 = arith.constant 0 : i32
    %c0_i32_1 = arith.constant 0 : i32
    return %c0_i32, %c0_i32_0 : i32, i32
  }
  func.func @transform_4(%arg0: i32) -> (i32, i32) {
    %c0_i32 = arith.constant 0 : i32
    %c0_i32_0 = arith.constant 0 : i32
    %c0_i32_1 = arith.constant 0 : i32
    return %c0_i32, %c0_i32_0 : i32, i32
  }
  func.func @transform_5(%arg0: i32) -> (i32, i32) {
    %c0_i32 = arith.constant 0 : i32
    %c0_i32_0 = arith.constant 0 : i32
    %c0_i32_1 = arith.constant 0 : i32
    return %c0_i32, %c0_i32_0 : i32, i32
  }
  func.func @transform_6(%arg0: i32) -> (i32, i32) {
    %c0_i32 = arith.constant 0 : i32
    %c0_i32_0 = arith.constant 0 : i32
    %c0_i32_1 = arith.constant 0 : i32
    return %c0_i32, %c0_i32_0 : i32, i32
  }
  func.func @transform_7(%arg0: i32) -> (i32, i32) {
    %c0_i32 = arith.constant 0 : i32
    %c0_i32_0 = arith.constant 0 : i32
    return %arg0, %c0_i32 : i32, i32
  }
  func.func @transform_8(%arg0: i32) -> (i32, i32) {
    %c0_i32 = arith.constant 0 : i32
    %c0_i32_0 = arith.constant 0 : i32
    return %arg0, %c0_i32 : i32, i32
  }
  func.func @transform_9(%arg0: i32) -> (i32, i32) {
    %c0_i32 = arith.constant 0 : i32
    %c0_i32_0 = arith.constant 0 : i32
    return %arg0, %c0_i32 : i32, i32
  }
}

</mosaic_0001>

<llo_original>
// kernel: tpu_custom_call.1
$region0: #{tpu_custom_call.1}
  #allocation0 [shape = 'u32[]', space=smem, size = 0x4, offset = 0x4, fixed_abs, tag = 'smem constant byte address 0x4 - core index']
  #allocation1 [shape = 'u32[72,128]{1,0:T(1,128)}', space=vmem, size = 0x9000, scoped, tag = 'internal scratch']
  %s0 = inlined_call_operand.hbm [shape: f32[16,128], index: 0, kind: input, shape index: {}]
  %s1 = inlined_call_operand.hbm [shape: f32[128,128], index: 1, kind: input, shape index: {}]
  %s2 = inlined_call_operand.vmem [shape: f32[1,128], index: 2, kind: input, shape index: {}]
  %s3 = inlined_call_operand.hbm [shape: f32[128,128], index: 3, kind: input, shape index: {}]
  %s4 = inlined_call_operand.vmem [shape: f32[1,128], index: 4, kind: input, shape index: {}]
  %s5 = inlined_call_operand.hbm [shape: f32[128,128], index: 5, kind: input, shape index: {}]
  %s6 = inlined_call_operand.vmem [shape: f32[1,128], index: 6, kind: input, shape index: {}]
  %s7 = inlined_call_operand.hbm [shape: f32[16,128], index: 7, kind: output, shape index: {0}]
  %s8 = inlined_call_operand.hbm [shape: f32[16,128], index: 8, kind: output, shape index: {1}]
  %s9 = inlined_call_operand.hbm [shape: f32[16,128], index: 9, kind: output, shape index: {2}]
  %10 = xla_tuple %s7, %s8, %s9
  %s11 = sld [smem:[#allocation0]]
  $region93: #{tpu_custom_call.1} parent=0
    _
  %s13 = ssub.s32 1, %s11
  %s14 = scalar_select 0, %s13, %s11
  $region1: #{tpu_custom_call.1} parent=0
    #allocation2 [shape = 'u8[8192]{0}', space=vmem, size = 0x2000, scoped, tag = 'input window, operand 0']
    #allocation3 [shape = 's32[2]{0}', space=sflag, size = 0x8, scoped, tag = 'scoped memory for tpu_custom_call.1']
    #allocation4 [shape = 's32[2]{0}', space=sflag, size = 0x8, scoped, tag = 'scoped memory for tpu_custom_call.1']
    #allocation5 [shape = 'u8[65536]{0}', space=vmem, size = 0x10000, scoped, tag = 'input window, operand 1, single buffered']
    #allocation6 [shape = 's32[1]{0}', space=sflag, size = 0x4, scoped, tag = 'scoped memory for tpu_custom_call.1']
    #allocation7 [shape = 'u8[65536]{0}', space=vmem, size = 0x10000, scoped, tag = 'input window, operand 3, single buffered']
    #allocation8 [shape = 'u8[65536]{0}', space=vmem, size = 0x10000, scoped, tag = 'input window, operand 5, single buffered']
    #allocation9 [shape = 's32[1]{0}', space=sflag, size = 0x4, scoped, tag = 'scoped memory for tpu_custom_call.1']
    #allocation10 [shape = 'u8[8192]{0}', space=vmem, size = 0x2000, scoped, tag = 'output window, operand 0']
    #allocation11 [shape = 'u8[8192]{0}', space=vmem, size = 0x2000, scoped, tag = 'output window, operand 1']
    #allocation12 [shape = 's32[2]{0}', space=sflag, size = 0x8, scoped, tag = 'scoped memory for tpu_custom_call.1']
    #allocation13 [shape = 'u8[8192]{0}', space=vmem, size = 0x2000, scoped, tag = 'output window, operand 2']
    %15 = vsyncpa [#allocation3], 0
    %s16 = scalar_lea.sflag [#allocation3], 1
    %17 = vsyncpa %s16, 0
    %18 = vsyncpa [#allocation6], 0
    %19 = vsyncpa [#allocation9], 0
    %20 = vsyncpa [#allocation4], 0
    %s21 = scalar_lea.sflag [#allocation4], 1
    %22 = vsyncpa %s21, 0
    %23 = vsyncpa [#allocation12], 0
    %s24 = scalar_lea.sflag [#allocation12], 1
    %25 = vsyncpa %s24, 0
    loop: start=0, step=1, limit=4
    $region2: #{tpu_custom_call.1} parent=1 // loop_pre_header
      _
    $region3: #{tpu_custom_call.1} parent=1 // loop_header
      %s27 = sphi 0, %s31
      %p28 = scmp.ge.s32.totalorder %s27, 4
      %s37 = sphi 0, %s39
      %s40 = sphi 0, %s37
      %s41 = sphi 0, %s40
      %s57 = sphi 0, %s41
      %s61 = sphi 0, %s61
      %s63 = sphi 0, %s61
      %s64 = sphi 0, %s63
      %s78 = sphi 0, %s64
      %s82 = sphi 0, %s82
      %s84 = sphi 0, %s82
      %s85 = sphi 0, %s84
      %s99 = sphi 0, %s85
      %s103 = sphi 0, %s103
      %s105 = sphi 0, %s103
      %s106 = sphi 0, %s105
      %s120 = sphi 0, %s106
      %s124 = sphi 0, %s124
      %s126 = sphi 0, %s124
      %s127 = sphi 0, %s126
      %s141 = sphi 0, %s127
      %s145 = sphi 0, %s145
      %s147 = sphi 0, %s145
      %s148 = sphi 0, %s147
      %s162 = sphi 0, %s148
      %s166 = sphi 0, %s166
      %s168 = sphi 0, %s166
      %s169 = sphi 0, %s168
      %s183 = sphi 0, %s169
      %s189 = sphi 0, %s191
      %s192 = sphi 0, %s189
      %s193 = sphi 0, %s192
      %s209 = sphi 0, %s193
      %s215 = sphi 0, %s217
      %s218 = sphi 0, %s215
      %s219 = sphi 0, %s218
      %s235 = sphi 0, %s219
      %s241 = sphi 0, %s243
      %s244 = sphi 0, %s241
      %s245 = sphi 0, %s244
      %s261 = sphi 0, %s245
    $region4: #{tpu_custom_call.1} parent=1 // loop_header_branch
      %30 = sbr.rel (%p28) target = $region8
    $region5: #{tpu_custom_call.1} parent=1 // loop_body
      %s32 = ssub.s32 %s27, 1
      %s33 = ssub.s32 %s27, 2
      %s34 = sadd.s32 %s27, 1
      %s35 = ssub.s32 %s27, %s34
      %p36 = scmp.eq.s32.totalorder %s35, 0
      %s38 = sadd.s32 %s37, 1
      %s39 = scalar_select %p36, %s37, %s38
      %p42 = pneg %p36
      %p43 = scmp.eq.s32.totalorder %s27, 1
      %p44 = por %p42, %p43
      %p45 = scmp.ne.s32.totalorder %s37, %s40
      %p46 = scmp.eq.s32.totalorder %s27, 0
      %p47 = por %p45, %p46
      %p48 = scmp.ne.s32.totalorder %s37, %s40
      %p49 = scmp.eq.s32.totalorder %s32, 1
      %p50 = por %p48, %p49
      %p51 = scmp.ne.s32.totalorder %s40, %s41
      %p52 = scmp.eq.s32.totalorder %s32, 0
      %p53 = por %p51, %p52
      %p54 = scmp.ne.s32.totalorder %s40, %s41
      %p55 = scmp.eq.s32.totalorder %s33, 1
      %p56 = por %p54, %p55
      %p58 = scmp.ne.s32.totalorder %s41, %s57
      %p59 = scmp.eq.s32.totalorder %s33, 0
      %p60 = por %p58, %p59
      %s62 = sadd.s32 %s61, 1
      %p65 = scmp.eq.s32.totalorder %s27, 1
      %p66 = scmp.ne.s32.totalorder %s61, %s63
      %p67 = scmp.eq.s32.totalorder %s27, 0
      %p68 = por %p66, %p67
      %p69 = scmp.ne.s32.totalorder %s61, %s63
      %p70 = scmp.eq.s32.totalorder %s32, 1
      %p71 = por %p69, %p70
      %p72 = scmp.ne.s32.totalorder %s63, %s64
      %p73 = scmp.eq.s32.totalorder %s32, 0
      %p74 = por %p72, %p73
      %p75 = scmp.ne.s32.totalorder %s63, %s64
      %p76 = scmp.eq.s32.totalorder %s33, 1
      %p77 = por %p75, %p76
      %p79 = scmp.ne.s32.totalorder %s64, %s78
      %p80 = scmp.eq.s32.totalorder %s33, 0
      %p81 = por %p79, %p80
      %s83 = sadd.s32 %s82, 1
      %p86 = scmp.eq.s32.totalorder %s27, 1
      %p87 = scmp.ne.s32.totalorder %s82, %s84
      %p88 = scmp.eq.s32.totalorder %s27, 0
      %p89 = por %p87, %p88
      %p90 = scmp.ne.s32.totalorder %s82, %s84
      %p91 = scmp.eq.s32.totalorder %s32, 1
      %p92 = por %p90, %p91
      %p93 = scmp.ne.s32.totalorder %s84, %s85
      %p94 = scmp.eq.s32.totalorder %s32, 0
      %p95 = por %p93, %p94
      %p96 = scmp.ne.s32.totalorder %s84, %s85
      %p97 = scmp.eq.s32.totalorder %s33, 1
      %p98 = por %p96, %p97
      %p100 = scmp.ne.s32.totalorder %s85, %s99
      %p101 = scmp.eq.s32.totalorder %s33, 0
      %p102 = por %p100, %p101
      %s104 = sadd.s32 %s103, 1
      %p107 = scmp.eq.s32.totalorder %s27, 1
      %p108 = scmp.ne.s32.totalorder %s103, %s105
      %p109 = scmp.eq.s32.totalorder %s27, 0
      %p110 = por %p108, %p109
      %p111 = scmp.ne.s32.totalorder %s103, %s105
      %p112 = scmp.eq.s32.totalorder %s32, 1
      %p113 = por %p111, %p112
      %p114 = scmp.ne.s32.totalorder %s105, %s106
      %p115 = scmp.eq.s32.totalorder %s32, 0
      %p116 = por %p114, %p115
      %p117 = scmp.ne.s32.totalorder %s105, %s106
      %p118 = scmp.eq.s32.totalorder %s33, 1
      %p119 = por %p117, %p118
      %p121 = scmp.ne.s32.totalorder %s106, %s120
      %p122 = scmp.eq.s32.totalorder %s33, 0
      %p123 = por %p121, %p122
      %s125 = sadd.s32 %s124, 1
      %p128 = scmp.eq.s32.totalorder %s27, 1
      %p129 = scmp.ne.s32.totalorder %s124, %s126
      %p130 = scmp.eq.s32.totalorder %s27, 0
      %p131 = por %p129, %p130
      %p132 = scmp.ne.s32.totalorder %s124, %s126
      %p133 = scmp.eq.s32.totalorder %s32, 1
      %p134 = por %p132, %p133
      %p135 = scmp.ne.s32.totalorder %s126, %s127
      %p136 = scmp.eq.s32.totalorder %s32, 0
      %p137 = por %p135, %p136
      %p138 = scmp.ne.s32.totalorder %s126, %s127
      %p139 = scmp.eq.s32.totalorder %s33, 1
      %p140 = por %p138, %p139
      %p142 = scmp.ne.s32.totalorder %s127, %s141
      %p143 = scmp.eq.s32.totalorder %s33, 0
      %p144 = por %p142, %p143
      %s146 = sadd.s32 %s145, 1
      %p149 = scmp.eq.s32.totalorder %s27, 1
      %p150 = scmp.ne.s32.totalorder %s145, %s147
      %p151 = scmp.eq.s32.totalorder %s27, 0
      %p152 = por %p150, %p151
      %p153 = scmp.ne.s32.totalorder %s145, %s147
      %p154 = scmp.eq.s32.totalorder %s32, 1
      %p155 = por %p153, %p154
      %p156 = scmp.ne.s32.totalorder %s147, %s148
      %p157 = scmp.eq.s32.totalorder %s32, 0
      %p158 = por %p156, %p157
      %p159 = scmp.ne.s32.totalorder %s147, %s148
      %p160 = scmp.eq.s32.totalorder %s33, 1
      %p161 = por %p159, %p160
      %p163 = scmp.ne.s32.totalorder %s148, %s162
      %p164 = scmp.eq.s32.totalorder %s33, 0
      %p165 = por %p163, %p164
      %s167 = sadd.s32 %s166, 1
      %p170 = scmp.eq.s32.totalorder %s27, 1
      %p171 = scmp.ne.s32.totalorder %s166, %s168
      %p172 = scmp.eq.s32.totalorder %s27, 0
      %p173 = por %p171, %p172
      %p174 = scmp.ne.s32.totalorder %s166, %s168
      %p175 = scmp.eq.s32.totalorder %s32, 1
      %p176 = por %p174, %p175
      %p177 = scmp.ne.s32.totalorder %s168, %s169
      %p178 = scmp.eq.s32.totalorder %s32, 0
      %p179 = por %p177, %p178
      %p180 = scmp.ne.s32.totalorder %s168, %s169
      %p181 = scmp.eq.s32.totalorder %s33, 1
      %p182 = por %p180, %p181
      %p184 = scmp.ne.s32.totalorder %s169, %s183
      %p185 = scmp.eq.s32.totalorder %s33, 0
      %p186 = por %p184, %p185
      %s187 = ssub.s32 %s27, %s34
      %p188 = scmp.eq.s32.totalorder %s187, 0
      %s190 = sadd.s32 %s189, 1
      %s191 = scalar_select %p188, %s189, %s190
      %p194 = pneg %p188
      %p195 = scmp.eq.s32.totalorder %s27, 1
      %p196 = por %p194, %p195
      %p197 = scmp.ne.s32.totalorder %s189, %s192
      %p198 = scmp.eq.s32.totalorder %s27, 0
      %p199 = por %p197, %p198
      %p200 = scmp.ne.s32.totalorder %s189, %s192
      %p201 = scmp.eq.s32.totalorder %s32, 1
      %p202 = por %p200, %p201
      %p203 = scmp.ne.s32.totalorder %s192, %s193
      %p204 = scmp.eq.s32.totalorder %s32, 0
      %p205 = por %p203, %p204
      %p206 = scmp.ne.s32.totalorder %s192, %s193
      %p207 = scmp.eq.s32.totalorder %s33, 1
      %p208 = por %p206, %p207
      %p210 = scmp.ne.s32.totalorder %s193, %s209
      %p211 = scmp.eq.s32.totalorder %s33, 0
      %p212 = por %p210, %p211
      %s213 = ssub.s32 %s27, %s34
      %p214 = scmp.eq.s32.totalorder %s213, 0
      %s216 = sadd.s32 %s215, 1
      %s217 = scalar_select %p214, %s215, %s216
      %p220 = pneg %p214
      %p221 = scmp.eq.s32.totalorder %s27, 1
      %p222 = por %p220, %p221
      %p223 = scmp.ne.s32.totalorder %s215, %s218
      %p224 = scmp.eq.s32.totalorder %s27, 0
      %p225 = por %p223, %p224
      %p226 = scmp.ne.s32.totalorder %s215, %s218
      %p227 = scmp.eq.s32.totalorder %s32, 1
      %p228 = por %p226, %p227
      %p229 = scmp.ne.s32.totalorder %s218, %s219
      %p230 = scmp.eq.s32.totalorder %s32, 0
      %p231 = por %p229, %p230
      %p232 = scmp.ne.s32.totalorder %s218, %s219
      %p233 = scmp.eq.s32.totalorder %s33, 1
      %p234 = por %p232, %p233
      %p236 = scmp.ne.s32.totalorder %s219, %s235
      %p237 = scmp.eq.s32.totalorder %s33, 0
      %p238 = por %p236, %p237
      %s239 = ssub.s32 %s27, %s34
      %p240 = scmp.eq.s32.totalorder %s239, 0
      %s242 = sadd.s32 %s241, 1
      %s243 = scalar_select %p240, %s241, %s242
      %p246 = pneg %p240
      %p247 = scmp.eq.s32.totalorder %s27, 1
      %p248 = por %p246, %p247
      %p249 = scmp.ne.s32.totalorder %s241, %s244
      %p250 = scmp.eq.s32.totalorder %s27, 0
      %p251 = por %p249, %p250
      %p252 = scmp.ne.s32.totalorder %s241, %s244
      %p253 = scmp.eq.s32.totalorder %s32, 1
      %p254 = por %p252, %p253
      %p255 = scmp.ne.s32.totalorder %s244, %s245
      %p256 = scmp.eq.s32.totalorder %s32, 0
      %p257 = por %p255, %p256
      %p258 = scmp.ne.s32.totalorder %s244, %s245
      %p259 = scmp.eq.s32.totalorder %s33, 1
      %p260 = por %p258, %p259
      %p262 = scmp.ne.s32.totalorder %s245, %s261
      %p263 = scmp.eq.s32.totalorder %s33, 0
      %p264 = por %p262, %p263
      %p265 = scmp.le.s32.totalorder 1, %s27
      %p266 = scmp.lt.s32.totalorder %s27, 3
      %p267 = pnand %p265, %p266
      %p268 = pneg %p267
      // Predicated region
      $region9: #{tpu_custom_call.1} parent=5 // pred_check
        _
      $region10: #{tpu_custom_call.1} parent=5 // pred_check_branch
        %270 = sbr.rel (%p267) target = $region12
      $region11: #{tpu_custom_call.1} parent=5 // pred_region
        %s271 = ssub.s32 %s27, 1
        // Predicated region
        $region13: #{tpu_custom_call.1} parent=11 // pred_check
          %p272 = pneg %p74
        $region14: #{tpu_custom_call.1} parent=11 // pred_check_branch
          %274 = sbr.rel (%p272) target = $region16
        $region15: #{tpu_custom_call.1} parent=11 // pred_region
          %276 = vsyncadd [#allocation6], 0
          %s277 = sshll.u32 %s1, 4
          %s278 = int_to_ptr.hbm [resolvable:$true] %s277
          %s279 = sshll.u32 [#allocation5], 4
          %s280 = int_to_ptr.vmem [resolvable:$true] %s279
          %285 = dma.hbm_to_vmem [thread:$0]  %s278, 2048, %s280, [#allocation6], 128, 128, 8
        $region16: #{tpu_custom_call.1} parent=11 // pred_fallthru
          _
        // Predicated region
        $region17: #{tpu_custom_call.1} parent=11 // pred_check
          %p286 = pneg %p95
        $region18: #{tpu_custom_call.1} parent=11 // pred_check_branch
          %288 = sbr.rel (%p286) target = $region20
        $region19: #{tpu_custom_call.1} parent=11 // pred_region
          _
        $region20: #{tpu_custom_call.1} parent=11 // pred_fallthru
          _
        // Predicated region
        $region21: #{tpu_custom_call.1} parent=11 // pred_check
          %p289 = pneg %p116
        $region22: #{tpu_custom_call.1} parent=11 // pred_check_branch
          %291 = sbr.rel (%p289) target = $region24
        $region23: #{tpu_custom_call.1} parent=11 // pred_region
          %293 = vsyncadd [#allocation6], 0
          %s294 = sshll.u32 %s3, 4
          %s295 = int_to_ptr.hbm [resolvable:$true] %s294
          %s296 = sshll.u32 [#allocation7], 4
          %s297 = int_to_ptr.vmem [resolvable:$true] %s296
          %302 = dma.hbm_to_vmem [thread:$0]  %s295, 2048, %s297, [#allocation6], 128, 128, 8
        $region24: #{tpu_custom_call.1} parent=11 // pred_fallthru
          _
        // Predicated region
        $region25: #{tpu_custom_call.1} parent=11 // pred_check
          %p303 = pneg %p137
        $region26: #{tpu_custom_call.1} parent=11 // pred_check_branch
          %305 = sbr.rel (%p303) target = $region28
        $region27: #{tpu_custom_call.1} parent=11 // pred_region
          _
        $region28: #{tpu_custom_call.1} parent=11 // pred_fallthru
          _
        // Predicated region
        $region29: #{tpu_custom_call.1} parent=11 // pred_check
          %p306 = pneg %p158
        $region30: #{tpu_custom_call.1} parent=11 // pred_check_branch
          %308 = sbr.rel (%p306) target = $region32
        $region31: #{tpu_custom_call.1} parent=11 // pred_region
          %310 = vsyncadd [#allocation9], 0
          %s311 = sshll.u32 %s5, 4
          %s312 = int_to_ptr.hbm [resolvable:$true] %s311
          %s313 = sshll.u32 [#allocation8], 4
          %s314 = int_to_ptr.vmem [resolvable:$true] %s313
          %319 = dma.hbm_to_vmem [thread:$0]  %s312, 2048, %s314, [#allocation9], 128, 128, 8
        $region32: #{tpu_custom_call.1} parent=11 // pred_fallthru
          _
        // Predicated region
        $region33: #{tpu_custom_call.1} parent=11 // pred_check
          %p320 = pneg %p179
        $region34: #{tpu_custom_call.1} parent=11 // pred_check_branch
          %322 = sbr.rel (%p320) target = $region36
        $region35: #{tpu_custom_call.1} parent=11 // pred_region
          _
        $region36: #{tpu_custom_call.1} parent=11 // pred_fallthru
          _
      $region12: #{tpu_custom_call.1} parent=5 // pred_fallthru
        _
      %p323 = scmp.lt.s32.totalorder %s27, 2
      // Predicated region
      $region37: #{tpu_custom_call.1} parent=5 // pred_check
        %p324 = pneg %p323
      $region38: #{tpu_custom_call.1} parent=5 // pred_check_branch
        %326 = sbr.rel (%p324) target = $region40
      $region39: #{tpu_custom_call.1} parent=5 // pred_region
        // Predicated region
        $region41: #{tpu_custom_call.1} parent=39 // pred_check
          %p327 = pneg %p47
        $region42: #{tpu_custom_call.1} parent=39 // pred_check_branch
          %329 = sbr.rel (%p327) target = $region44
        $region43: #{tpu_custom_call.1} parent=39 // pred_region
          %s330 = sand.u32 %s37, 1
          %s331 = scalar_lea.sflag [#allocation3], %s330
          %s332 = sand.u32 %s37, 1
          %s333 = smul.addr %s332, 8
          %s334 = scalar_lea.vmem [#allocation2], %s333
          %336 = vsyncadd %s331, 0
          %s337 = smul.addr %s27, 8
          %s338 = scalar_lea.hbm %s0, %s337
          %s340 = sshll.u32 %s338, 4
          %s341 = int_to_ptr.hbm [resolvable:$true] %s340
          %s342 = sshll.u32 %s334, 4
          %s343 = int_to_ptr.vmem [resolvable:$true] %s342
          %345 = dma.hbm_to_vmem [thread:$0]  %s341, 128, %s343, %s331
        $region44: #{tpu_custom_call.1} parent=39 // pred_fallthru
          _
      $region40: #{tpu_custom_call.1} parent=5 // pred_fallthru
        _
      %p346 = scmp.le.s32.totalorder 1, %s27
      %p347 = scmp.lt.s32.totalorder %s27, 3
      %p348 = pnand %p346, %p347
      %p349 = pneg %p348
      // Predicated region
      $region45: #{tpu_custom_call.1} parent=5 // pred_check
        _
      $region46: #{tpu_custom_call.1} parent=5 // pred_check_branch
        %351 = sbr.rel (%p348) target = $region48
      $region47: #{tpu_custom_call.1} parent=5 // pred_region
        %s352 = ssub.s32 %s27, 1
        %s353 = sand.u32 %s40, 1
        %s354 = scalar_lea.sflag [#allocation3], %s353
        %s355 = sand.u32 %s40, 1
        %s356 = smul.addr %s355, 8
        %s357 = scalar_lea.vmem [#allocation2], %s356
        // Predicated region
        $region49: #{tpu_custom_call.1} parent=47 // pred_check
          %p358 = pneg %p53
        $region50: #{tpu_custom_call.1} parent=47 // pred_check_branch
          %360 = sbr.rel (%p358) target = $region52
        $region51: #{tpu_custom_call.1} parent=47 // pred_region
          %362 = dma.done %s354, 128
        $region52: #{tpu_custom_call.1} parent=47 // pred_fallthru
          _
        // Predicated region
        $region53: #{tpu_custom_call.1} parent=47 // pred_check
          %p363 = pneg %p74
        $region54: #{tpu_custom_call.1} parent=47 // pred_check_branch
          %365 = sbr.rel (%p363) target = $region56
        $region55: #{tpu_custom_call.1} parent=47 // pred_region
          %367 = dma.done [#allocation6], 2048
        $region56: #{tpu_custom_call.1} parent=47 // pred_fallthru
          _
        // Predicated region
        $region57: #{tpu_custom_call.1} parent=47 // pred_check
          %p368 = pneg %p116
        $region58: #{tpu_custom_call.1} parent=47 // pred_check_branch
          %370 = sbr.rel (%p368) target = $region60
        $region59: #{tpu_custom_call.1} parent=47 // pred_region
          %372 = dma.done [#allocation6], 2048
        $region60: #{tpu_custom_call.1} parent=47 // pred_fallthru
          _
        // Predicated region
        $region61: #{tpu_custom_call.1} parent=47 // pred_check
          %p373 = pneg %p158
        $region62: #{tpu_custom_call.1} parent=47 // pred_check_branch
          %375 = sbr.rel (%p373) target = $region64
        $region63: #{tpu_custom_call.1} parent=47 // pred_region
          %377 = dma.done [#allocation9], 2048
        $region64: #{tpu_custom_call.1} parent=47 // pred_fallthru
          _
        %s378 = sand.u32 %s40, 1
        %s379 = scalar_lea.sflag [#allocation3], %s378
        %s380 = sand.u32 %s40, 1
        %s381 = smul.addr %s380, 8
        %s382 = scalar_lea.vmem [#allocation2], %s381
        %p383 = pneg %p53
        %p384 = pneg %p50
        %p385 = pneg %p74
        %p386 = pneg %p71
        %p387 = pneg %p95
        %p388 = pneg %p92
        %p389 = pneg %p116
        %p390 = pneg %p113
        %p391 = pneg %p137
        %p392 = pneg %p134
        %p393 = pneg %p158
        %p394 = pneg %p155
        %p395 = pneg %p179
        %p396 = pneg %p176
        %p397 = pneg %p205
        %p398 = pneg %p202
        %s399 = sand.u32 %s192, 1
        %s400 = scalar_lea.sflag [#allocation4], %s399
        %s401 = sand.u32 %s192, 1
        %s402 = smul.addr %s401, 8
        %s403 = scalar_lea.vmem [#allocation10], %s402
        %p404 = pneg %p231
        %p405 = pneg %p228
        %s406 = sand.u32 %s32, 1
        %s407 = scalar_lea.sflag [#allocation12], %s406
        %s408 = sand.u32 %s218, 1
        %s409 = smul.addr %s408, 8
        %s410 = scalar_lea.vmem [#allocation11], %s409
        %p411 = pneg %p257
        %p412 = pneg %p254
        %s413 = sand.u32 %s32, 1
        %s414 = scalar_lea.sflag [#allocation12], %s413
        %s415 = sand.u32 %s244, 1
        %s416 = smul.addr %s415, 8
        %s417 = scalar_lea.vmem [#allocation13], %s416
        %v418 = vld [vmem:[%s357] sm:$0xff]
        %v419 = vld [vmem:[#allocation5] sm:$0xff]
        %v420 = vld [vmem:[#allocation5 + $0x8] sm:$0xff]
        %v421 = vld [vmem:[#allocation5 + $0x10] sm:$0xff]
        %v422 = vld [vmem:[#allocation5 + $0x18] sm:$0xff]
        %v423 = vld [vmem:[#allocation5 + $0x20] sm:$0xff]
        %v424 = vld [vmem:[#allocation5 + $0x28] sm:$0xff]
        %v425 = vld [vmem:[#allocation5 + $0x30] sm:$0xff]
        %v426 = vld [vmem:[#allocation5 + $0x38] sm:$0xff]
        %v427 = vld [vmem:[#allocation5 + $0x40] sm:$0xff]
        %v428 = vld [vmem:[#allocation5 + $0x48] sm:$0xff]
        %v429 = vld [vmem:[#allocation5 + $0x50] sm:$0xff]
        %v430 = vld [vmem:[#allocation5 + $0x58] sm:$0xff]
        %v431 = vld [vmem:[#allocation5 + $0x60] sm:$0xff]
        %v432 = vld [vmem:[#allocation5 + $0x68] sm:$0xff]
        %v433 = vld [vmem:[#allocation5 + $0x70] sm:$0xff]
        %v434 = vld [vmem:[#allocation5 + $0x78] sm:$0xff]
        %v435 = vld [vmem:[%s2] sm:$0x1]
        %v437 = vperm.slane %v435, 0
        %439 = vmatpush.msra.mxu0 %v434
        %440 = vmatpush.msra.mxu0 %v433
        %441 = vmatpush.msra.mxu0 %v432
        %442 = vmatpush.msra.mxu0 %v431
        %443 = vmatpush.msra.mxu0 %v430
        %444 = vmatpush.msra.mxu0 %v429
        %445 = vmatpush.msra.mxu0 %v428
        %446 = vmatpush.msra.mxu0 %v427
        %447 = vmatpush.msra.mxu0 %v426
        %448 = vmatpush.msra.mxu0 %v425
        %449 = vmatpush.msra.mxu0 %v424
        %450 = vmatpush.msra.mxu0 %v423
        %451 = vmatpush.msra.mxu0 %v422
        %452 = vmatpush.msra.mxu0 %v421
        %453 = vmatpush.msra.mxu0 %v420
        %454 = vmatpush.msra.mxu0 %v419
        %455 = vmatmul.f32.gmra.mxu0 %v418
        %v456 = vpop.f32.mrf.mxu0
        %v457 = vadd.f32 %v437, %v456
        %458 = vdwg.mxu0
        %v459 = vmax.f32 %v457, 0.0
        %460 = vst [vmem:[%s403] sm:$0xff] %v459
        %v461 = vld [vmem:[#allocation7] sm:$0xff]
        %v462 = vld [vmem:[#allocation7 + $0x8] sm:$0xff]
        %v463 = vld [vmem:[#allocation7 + $0x10] sm:$0xff]
        %v464 = vld [vmem:[#allocation7 + $0x18] sm:$0xff]
        %v465 = vld [vmem:[#allocation7 + $0x20] sm:$0xff]
        %v466 = vld [vmem:[#allocation7 + $0x28] sm:$0xff]
        %v467 = vld [vmem:[#allocation7 + $0x30] sm:$0xff]
        %v468 = vld [vmem:[#allocation7 + $0x38] sm:$0xff]
        %v469 = vld [vmem:[#allocation7 + $0x40] sm:$0xff]
        %v470 = vld [vmem:[#allocation7 + $0x48] sm:$0xff]
        %v471 = vld [vmem:[#allocation7 + $0x50] sm:$0xff]
        %v472 = vld [vmem:[#allocation7 + $0x58] sm:$0xff]
        %v473 = vld [vmem:[#allocation7 + $0x60] sm:$0xff]
        %v474 = vld [vmem:[#allocation7 + $0x68] sm:$0xff]
        %v475 = vld [vmem:[#allocation7 + $0x70] sm:$0xff]
        %v476 = vld [vmem:[#allocation7 + $0x78] sm:$0xff]
        %v477 = vld [vmem:[%s4] sm:$0x1]
        %v479 = vperm.slane %v477, 0
        %481 = vmatpush.msra.mxu0 %v476
        %482 = vmatpush.msra.mxu0 %v475
        %483 = vmatpush.msra.mxu0 %v474
        %484 = vmatpush.msra.mxu0 %v473
        %485 = vmatpush.msra.mxu0 %v472
        %486 = vmatpush.msra.mxu0 %v471
        %487 = vmatpush.msra.mxu0 %v470
        %488 = vmatpush.msra.mxu0 %v469
        %489 = vmatpush.msra.mxu0 %v468
        %490 = vmatpush.msra.mxu0 %v467
        %491 = vmatpush.msra.mxu0 %v466
        %492 = vmatpush.msra.mxu0 %v465
        %493 = vmatpush.msra.mxu0 %v464
        %494 = vmatpush.msra.mxu0 %v463
        %495 = vmatpush.msra.mxu0 %v462
        %496 = vmatpush.msra.mxu0 %v461
        %497 = vmatmul.f32.gmra.mxu0 %v459
        %v498 = vpop.f32.mrf.mxu0
        %v499 = vadd.f32 %v479, %v498
        %500 = vdwg.mxu0
        %v501 = vmax.f32 %v499, 0.0
        %502 = vst [vmem:[%s410] sm:$0xff] %v501
        %v503 = vld [vmem:[#allocation8] sm:$0xff]
        %v504 = vld [vmem:[#allocation8 + $0x8] sm:$0xff]
        %v505 = vld [vmem:[#allocation8 + $0x10] sm:$0xff]
        %v506 = vld [vmem:[#allocation8 + $0x18] sm:$0xff]
        %v507 = vld [vmem:[#allocation8 + $0x20] sm:$0xff]
        %v508 = vld [vmem:[#allocation8 + $0x28] sm:$0xff]
        %v509 = vld [vmem:[#allocation8 + $0x30] sm:$0xff]
        %v510 = vld [vmem:[#allocation8 + $0x38] sm:$0xff]
        %v511 = vld [vmem:[#allocation8 + $0x40] sm:$0xff]
        %v512 = vld [vmem:[#allocation8 + $0x48] sm:$0xff]
        %v513 = vld [vmem:[#allocation8 + $0x50] sm:$0xff]
        %v514 = vld [vmem:[#allocation8 + $0x58] sm:$0xff]
        %v515 = vld [vmem:[#allocation8 + $0x60] sm:$0xff]
        %v516 = vld [vmem:[#allocation8 + $0x68] sm:$0xff]
        %v517 = vld [vmem:[#allocation8 + $0x70] sm:$0xff]
        %v518 = vld [vmem:[#allocation8 + $0x78] sm:$0xff]
        %v519 = vld [vmem:[%s6] sm:$0x1]
        %v521 = vperm.slane %v519, 0
        %523 = vmatpush.msra.mxu0 %v518
        %524 = vmatpush.msra.mxu0 %v517
        %525 = vmatpush.msra.mxu0 %v516
        %526 = vmatpush.msra.mxu0 %v515
        %527 = vmatpush.msra.mxu0 %v514
        %528 = vmatpush.msra.mxu0 %v513
        %529 = vmatpush.msra.mxu0 %v512
        %530 = vmatpush.msra.mxu0 %v511
        %531 = vmatpush.msra.mxu0 %v510
        %532 = vmatpush.msra.mxu0 %v509
        %533 = vmatpush.msra.mxu0 %v508
        %534 = vmatpush.msra.mxu0 %v507
        %535 = vmatpush.msra.mxu0 %v506
        %536 = vmatpush.msra.mxu0 %v505
        %537 = vmatpush.msra.mxu0 %v504
        %538 = vmatpush.msra.mxu0 %v503
        %539 = vmatmul.f32.gmra.mxu0 %v501
        %v540 = vpop.f32.mrf.mxu0
        %v541 = vadd.f32 %v521, %v540
        %542 = vdwg.mxu0
        %543 = vst [vmem:[%s417] sm:$0xff] %v541
        %s544 = sand.u32 %s192, 1
        %s545 = scalar_lea.sflag [#allocation4], %s544
        %s546 = sand.u32 %s192, 1
        %s547 = smul.addr %s546, 8
        %s548 = scalar_lea.vmem [#allocation10], %s547
        %s549 = sand.u32 %s32, 1
        %s550 = scalar_lea.sflag [#allocation12], %s549
        %s551 = sand.u32 %s218, 1
        %s552 = smul.addr %s551, 8
        %s553 = scalar_lea.vmem [#allocation11], %s552
        %s554 = sand.u32 %s32, 1
        %s555 = scalar_lea.sflag [#allocation12], %s554
        %s556 = sand.u32 %s244, 1
        %s557 = smul.addr %s556, 8
        %s558 = scalar_lea.vmem [#allocation13], %s557
        // Predicated region
        $region65: #{tpu_custom_call.1} parent=47 // pred_check
          %p559 = pneg %p202
        $region66: #{tpu_custom_call.1} parent=47 // pred_check_branch
          %561 = sbr.rel (%p559) target = $region68
        $region67: #{tpu_custom_call.1} parent=47 // pred_region
          %563 = vsyncadd %s545, 0
          %s564 = smul.addr %s32, 8
          %s565 = scalar_lea.hbm %s7, %s564
          %s567 = sshll.u32 %s548, 4
          %s568 = int_to_ptr.vmem [resolvable:$true] %s567
          %s569 = sshll.u32 %s565, 4
          %s570 = int_to_ptr.hbm [resolvable:$true] %s569
          %572 = dma.vmem_to_hbm [thread:$0]  %s568, 128, %s570, %s545
        $region68: #{tpu_custom_call.1} parent=47 // pred_fallthru
          _
        // Predicated region
        $region69: #{tpu_custom_call.1} parent=47 // pred_check
          %p573 = pneg %p228
        $region70: #{tpu_custom_call.1} parent=47 // pred_check_branch
          %575 = sbr.rel (%p573) target = $region72
        $region71: #{tpu_custom_call.1} parent=47 // pred_region
          %577 = vsyncadd %s550, 0
          %s578 = smul.addr %s32, 8
          %s579 = scalar_lea.hbm %s8, %s578
          %s581 = sshll.u32 %s553, 4
          %s582 = int_to_ptr.vmem [resolvable:$true] %s581
          %s583 = sshll.u32 %s579, 4
          %s584 = int_to_ptr.hbm [resolvable:$true] %s583
          %586 = dma.vmem_to_hbm [thread:$0]  %s582, 128, %s584, %s550
        $region72: #{tpu_custom_call.1} parent=47 // pred_fallthru
          _
        // Predicated region
        $region73: #{tpu_custom_call.1} parent=47 // pred_check
          %p587 = pneg %p254
        $region74: #{tpu_custom_call.1} parent=47 // pred_check_branch
          %589 = sbr.rel (%p587) target = $region76
        $region75: #{tpu_custom_call.1} parent=47 // pred_region
          %591 = vsyncadd %s555, 0
          %s592 = smul.addr %s32, 8
          %s593 = scalar_lea.hbm %s9, %s592
          %s595 = sshll.u32 %s558, 4
          %s596 = int_to_ptr.vmem [resolvable:$true] %s595
          %s597 = sshll.u32 %s593, 4
          %s598 = int_to_ptr.hbm [resolvable:$true] %s597
          %600 = dma.vmem_to_hbm [thread:$0]  %s596, 128, %s598, %s555
        $region76: #{tpu_custom_call.1} parent=47 // pred_fallthru
          _
      $region48: #{tpu_custom_call.1} parent=5 // pred_fallthru
        _
      %p601 = scmp.le.s32.totalorder 2, %s27
      // Predicated region
      $region77: #{tpu_custom_call.1} parent=5 // pred_check
        %p602 = pneg %p601
      $region78: #{tpu_custom_call.1} parent=5 // pred_check_branch
        %604 = sbr.rel (%p602) target = $region80
      $region79: #{tpu_custom_call.1} parent=5 // pred_region
        %s605 = ssub.s32 %s27, 2
        // Predicated region
        $region81: #{tpu_custom_call.1} parent=79 // pred_check
          %p606 = pneg %p208
        $region82: #{tpu_custom_call.1} parent=79 // pred_check_branch
          %608 = sbr.rel (%p606) target = $region84
        $region83: #{tpu_custom_call.1} parent=79 // pred_region
          %s609 = sand.u32 %s193, 1
          %s610 = scalar_lea.sflag [#allocation4], %s609
          %s611 = sand.u32 %s193, 1
          %s612 = smul.addr %s611, 8
          %s613 = scalar_lea.vmem [#allocation10], %s612
          %615 = dma.done %s610, 128
        $region84: #{tpu_custom_call.1} parent=79 // pred_fallthru
          _
        // Predicated region
        $region85: #{tpu_custom_call.1} parent=79 // pred_check
          %p616 = pneg %p234
        $region86: #{tpu_custom_call.1} parent=79 // pred_check_branch
          %618 = sbr.rel (%p616) target = $region88
        $region87: #{tpu_custom_call.1} parent=79 // pred_region
          %s619 = sand.u32 %s33, 1
          %s620 = scalar_lea.sflag [#allocation12], %s619
          %s621 = sand.u32 %s219, 1
          %s622 = smul.addr %s621, 8
          %s623 = scalar_lea.vmem [#allocation11], %s622
          %625 = dma.done %s620, 128
        $region88: #{tpu_custom_call.1} parent=79 // pred_fallthru
          _
        // Predicated region
        $region89: #{tpu_custom_call.1} parent=79 // pred_check
          %p626 = pneg %p260
        $region90: #{tpu_custom_call.1} parent=79 // pred_check_branch
          %628 = sbr.rel (%p626) target = $region92
        $region91: #{tpu_custom_call.1} parent=79 // pred_region
          %s629 = sand.u32 %s33, 1
          %s630 = scalar_lea.sflag [#allocation12], %s629
          %s631 = sand.u32 %s245, 1
          %s632 = smul.addr %s631, 8
          %s633 = scalar_lea.vmem [#allocation13], %s632
          %635 = dma.done %s630, 128
        $region92: #{tpu_custom_call.1} parent=79 // pred_fallthru
          _
      $region80: #{tpu_custom_call.1} parent=5 // pred_fallthru
        _
    $region6: #{tpu_custom_call.1} parent=1 // loop_footer
      %s31 = sadd.s32 1, %s27
    $region7: #{tpu_custom_call.1} parent=1 // loop_footer_branch
      %26 = sbr.rel target = $region3
    $region8: #{tpu_custom_call.1} parent=1 // loop_exit
      _
    %636 = vsyncpa [#allocation3], 1
    %s637 = scalar_lea.sflag [#allocation3], 1
    %638 = vsyncpa %s637, 1
    %639 = vsyncpa [#allocation6], 1
    %640 = vsyncpa [#allocation9], 1
    %641 = vsyncpa [#allocation4], 1
    %s642 = scalar_lea.sflag [#allocation4], 1
    %643 = vsyncpa %s642, 1
    %644 = vsyncpa [#allocation12], 1
    %s645 = scalar_lea.sflag [#allocation12], 1
    %646 = vsyncpa %s645, 1

// kernel: tpu_custom_call.1
$region0: #{tpu_custom_call.1}
  #allocation0 [shape = 'u32[]', space=smem, size = 0x4, offset = 0x4, fixed_abs, tag = 'smem constant byte address 0x4 - core index']
  #allocation1 [shape = 'u32[72,128]{1,0:T(1,128)}', space=vmem, size = 0x9000, scoped, tag = 'internal scratch']
  %s0 = inlined_call_operand.hbm [shape: f32[16,128], index: 0, kind: input, shape index: {}]
  %s1 = inlined_call_operand.hbm [shape: f32[128,128], index: 1, kind: input, shape index: {}]
  %s2 = inlined_call_operand.vmem [shape: f32[1,128], index: 2, kind: input, shape index: {}]
  %s3 = inlined_call_operand.hbm [shape: f32[128,128], index: 3, kind: input, shape index: {}]
  %s4 = inlined_call_operand.vmem [shape: f32[1,128], index: 4, kind: input, shape index: {}]
  %s5 = inlined_call_operand.hbm [shape: f32[128,128], index: 5, kind: input, shape index: {}]
  %s6 = inlined_call_operand.vmem [shape: f32[1,128], index: 6, kind: input, shape index: {}]
  %s7 = inlined_call_operand.hbm [shape: f32[16,128], index: 7, kind: output, shape index: {0}]
  %s8 = inlined_call_operand.hbm [shape: f32[16,128], index: 8, kind: output, shape index: {1}]
  %s9 = inlined_call_operand.hbm [shape: f32[16,128], index: 9, kind: output, shape index: {2}]
  %10 = xla_tuple %s7, %s8, %s9
  %s11 = sld [smem:[#allocation0]]
  $region93: #{tpu_custom_call.1} parent=0
    _
  %s13 = ssub.s32 1, %s11
  %s14 = scalar_select 0, %s13, %s11
  $region1: #{tpu_custom_call.1} parent=0
    #allocation2 [shape = 'u8[8192]{0}', space=vmem, size = 0x2000, scoped, tag = 'input window, operand 0']
    #allocation3 [shape = 's32[2]{0}', space=sflag, size = 0x8, scoped, tag = 'scoped memory for tpu_custom_call.1']
    #allocation4 [shape = 's32[2]{0}', space=sflag, size = 0x8, scoped, tag = 'scoped memory for tpu_custom_call.1']
    #allocation5 [shape = 'u8[65536]{0}', space=vmem, size = 0x10000, scoped, tag = 'input window, operand 1, single buffered']
    #allocation6 [shape = 's32[1]{0}', space=sflag, size = 0x4, scoped, tag = 'scoped memory for tpu_custom_call.1']
    #allocation7 [shape = 'u8[65536]{0}', space=vmem, size = 0x10000, scoped, tag = 'input window, operand 3, single buffered']
    #allocation8 [shape = 'u8[65536]{0}', space=vmem, size = 0x10000, scoped, tag = 'input window, operand 5, single buffered']
    #allocation9 [shape = 's32[1]{0}', space=sflag, size = 0x4, scoped, tag = 'scoped memory for tpu_custom_call.1']
    #allocation10 [shape = 'u8[8192]{0}', space=vmem, size = 0x2000, scoped, tag = 'output window, operand 0']
    #allocation11 [shape = 'u8[8192]{0}', space=vmem, size = 0x2000, scoped, tag = 'output window, operand 1']
    #allocation12 [shape = 's32[2]{0}', space=sflag, size = 0x8, scoped, tag = 'scoped memory for tpu_custom_call.1']
    #allocation13 [shape = 'u8[8192]{0}', space=vmem, size = 0x2000, scoped, tag = 'output window, operand 2']
    %15 = vsyncpa [#allocation3], 0
    %s16 = scalar_lea.sflag [#allocation3], 1
    %17 = vsyncpa %s16, 0
    %18 = vsyncpa [#allocation6], 0
    %19 = vsyncpa [#allocation9], 0
    %20 = vsyncpa [#allocation4], 0
    %s21 = scalar_lea.sflag [#allocation4], 1
    %22 = vsyncpa %s21, 0
    %23 = vsyncpa [#allocation12], 0
    %s24 = scalar_lea.sflag [#allocation12], 1
    %25 = vsyncpa %s24, 0
    loop: start=0, step=1, limit=4
    $region2: #{tpu_custom_call.1} parent=1 // loop_pre_header
      _
    $region3: #{tpu_custom_call.1} parent=1 // loop_header
      %s27 = sphi 0, %s31
      %p28 = scmp.ge.s32.totalorder %s27, 4
      %s37 = sphi 0, %s39
      %s40 = sphi 0, %s37
      %s41 = sphi 0, %s40
      %s57 = sphi 0, %s41
      %s61 = sphi 0, %s61
      %s63 = sphi 0, %s61
      %s64 = sphi 0, %s63
      %s78 = sphi 0, %s64
      %s82 = sphi 0, %s82
      %s84 = sphi 0, %s82
      %s85 = sphi 0, %s84
      %s99 = sphi 0, %s85
      %s103 = sphi 0, %s103
      %s105 = sphi 0, %s103
      %s106 = sphi 0, %s105
      %s120 = sphi 0, %s106
      %s124 = sphi 0, %s124
      %s126 = sphi 0, %s124
      %s127 = sphi 0, %s126
      %s141 = sphi 0, %s127
      %s145 = sphi 0, %s145
      %s147 = sphi 0, %s145
      %s148 = sphi 0, %s147
      %s162 = sphi 0, %s148
      %s166 = sphi 0, %s166
      %s168 = sphi 0, %s166
      %s169 = sphi 0, %s168
      %s183 = sphi 0, %s169
      %s189 = sphi 0, %s191
      %s192 = sphi 0, %s189
      %s193 = sphi 0, %s192
      %s209 = sphi 0, %s193
      %s215 = sphi 0, %s217
      %s218 = sphi 0, %s215
      %s219 = sphi 0, %s218
      %s235 = sphi 0, %s219
      %s241 = sphi 0, %s243
      %s244 = sphi 0, %s241
      %s245 = sphi 0, %s244
      %s261 = sphi 0, %s245
    $region4: #{tpu_custom_call.1} parent=1 // loop_header_branch
      %30 = sbr.rel (%p28) target = $region8
    $region5: #{tpu_custom_call.1} parent=1 // loop_body
      %s32 = ssub.s32 %s27, 1
      %s33 = ssub.s32 %s27, 2
      %s34 = sadd.s32 %s27, 1
      %s35 = ssub.s32 %s27, %s34
      %p36 = scmp.eq.s32.totalorder %s35, 0
      %s38 = sadd.s32 %s37, 1
      %s39 = scalar_select %p36, %s37, %s38
      %p42 = pneg %p36
      %p43 = scmp.eq.s32.totalorder %s27, 1
      %p44 = por %p42, %p43
      %p45 = scmp.ne.s32.totalorder %s37, %s40
      %p46 = scmp.eq.s32.totalorder %s27, 0
      %p47 = por %p45, %p46
      %p48 = scmp.ne.s32.totalorder %s37, %s40
      %p49 = scmp.eq.s32.totalorder %s32, 1
      %p50 = por %p48, %p49
      %p51 = scmp.ne.s32.totalorder %s40, %s41
      %p52 = scmp.eq.s32.totalorder %s32, 0
      %p53 = por %p51, %p52
      %p54 = scmp.ne.s32.totalorder %s40, %s41
      %p55 = scmp.eq.s32.totalorder %s33, 1
      %p56 = por %p54, %p55
      %p58 = scmp.ne.s32.totalorder %s41, %s57
      %p59 = scmp.eq.s32.totalorder %s33, 0
      %p60 = por %p58, %p59
      %s62 = sadd.s32 %s61, 1
      %p65 = scmp.eq.s32.totalorder %s27, 1
      %p66 = scmp.ne.s32.totalorder %s61, %s63
      %p67 = scmp.eq.s32.totalorder %s27, 0
      %p68 = por %p66, %p67
      %p69 = scmp.ne.s32.totalorder %s61, %s63
      %p70 = scmp.eq.s32.totalorder %s32, 1
      %p71 = por %p69, %p70
      %p72 = scmp.ne.s32.totalorder %s63, %s64
      %p73 = scmp.eq.s32.totalorder %s32, 0
      %p74 = por %p72, %p73
      %p75 = scmp.ne.s32.totalorder %s63, %s64
      %p76 = scmp.eq.s32.totalorder %s33, 1
      %p77 = por %p75, %p76
      %p79 = scmp.ne.s32.totalorder %s64, %s78
      %p80 = scmp.eq.s32.totalorder %s33, 0
      %p81 = por %p79, %p80
      %s83 = sadd.s32 %s82, 1
      %p86 = scmp.eq.s32.totalorder %s27, 1
      %p87 = scmp.ne.s32.totalorder %s82, %s84
      %p88 = scmp.eq.s32.totalorder %s27, 0
      %p89 = por %p87, %p88
      %p90 = scmp.ne.s32.totalorder %s82, %s84
      %p91 = scmp.eq.s32.totalorder %s32, 1
      %p92 = por %p90, %p91
      %p93 = scmp.ne.s32.totalorder %s84, %s85
      %p94 = scmp.eq.s32.totalorder %s32, 0
      %p95 = por %p93, %p94
      %p96 = scmp.ne.s32.totalorder %s84, %s85
      %p97 = scmp.eq.s32.totalorder %s33, 1
      %p98 = por %p96, %p97
      %p100 = scmp.ne.s32.totalorder %s85, %s99
      %p101 = scmp.eq.s32.totalorder %s33, 0
      %p102 = por %p100, %p101
      %s104 = sadd.s32 %s103, 1
      %p107 = scmp.eq.s32.totalorder %s27, 1
      %p108 = scmp.ne.s32.totalorder %s103, %s105
      %p109 = scmp.eq.s32.totalorder %s27, 0
      %p110 = por %p108, %p109
      %p111 = scmp.ne.s32.totalorder %s103, %s105
      %p112 = scmp.eq.s32.totalorder %s32, 1
      %p113 = por %p111, %p112
      %p114 = scmp.ne.s32.totalorder %s105, %s106
      %p115 = scmp.eq.s32.totalorder %s32, 0
      %p116 = por %p114, %p115
      %p117 = scmp.ne.s32.totalorder %s105, %s106
      %p118 = scmp.eq.s32.totalorder %s33, 1
      %p119 = por %p117, %p118
      %p121 = scmp.ne.s32.totalorder %s106, %s120
      %p122 = scmp.eq.s32.totalorder %s33, 0
      %p123 = por %p121, %p122
      %s125 = sadd.s32 %s124, 1
      %p128 = scmp.eq.s32.totalorder %s27, 1
      %p129 = scmp.ne.s32.totalorder %s124, %s126
      %p130 = scmp.eq.s32.totalorder %s27, 0
      %p131 = por %p129, %p130
      %p132 = scmp.ne.s32.totalorder %s124, %s126
      %p133 = scmp.eq.s32.totalorder %s32, 1
      %p134 = por %p132, %p133
      %p135 = scmp.ne.s32.totalorder %s126, %s127
      %p136 = scmp.eq.s32.totalorder %s32, 0
      %p137 = por %p135, %p136
      %p138 = scmp.ne.s32.totalorder %s126, %s127
      %p139 = scmp.eq.s32.totalorder %s33, 1
      %p140 = por %p138, %p139
      %p142 = scmp.ne.s32.totalorder %s127, %s141
      %p143 = scmp.eq.s32.totalorder %s33, 0
      %p144 = por %p142, %p143
      %s146 = sadd.s32 %s145, 1
      %p149 = scmp.eq.s32.totalorder %s27, 1
      %p150 = scmp.ne.s32.totalorder %s145, %s147
      %p151 = scmp.eq.s32.totalorder %s27, 0
      %p152 = por %p150, %p151
      %p153 = scmp.ne.s32.totalorder %s145, %s147
      %p154 = scmp.eq.s32.totalorder %s32, 1
      %p155 = por %p153, %p154
      %p156 = scmp.ne.s32.totalorder %s147, %s148
      %p157 = scmp.eq.s32.totalorder %s32, 0
      %p158 = por %p156, %p157
      %p159 = scmp.ne.s32.totalorder %s147, %s148
      %p160 = scmp.eq.s32.totalorder %s33, 1
      %p161 = por %p159, %p160
      %p163 = scmp.ne.s32.totalorder %s148, %s162
      %p164 = scmp.eq.s32.totalorder %s33, 0
      %p165 = por %p163, %p164
      %s167 = sadd.s32 %s166, 1
      %p170 = scmp.eq.s32.totalorder %s27, 1
      %p171 = scmp.ne.s32.totalorder %s166, %s168
      %p172 = scmp.eq.s32.totalorder %s27, 0
      %p173 = por %p171, %p172
      %p174 = scmp.ne.s32.totalorder %s166, %s168
      %p175 = scmp.eq.s32.totalorder %s32, 1
      %p176 = por %p174, %p175
      %p177 = scmp.ne.s32.totalorder %s168, %s169
      %p178 = scmp.eq.s32.totalorder %s32, 0
      %p179 = por %p177, %p178
      %p180 = scmp.ne.s32.totalorder %s168, %s169
      %p181 = scmp.eq.s32.totalorder %s33, 1
      %p182 = por %p180, %p181
      %p184 = scmp.ne.s32.totalorder %s169, %s183
      %p185 = scmp.eq.s32.totalorder %s33, 0
      %p186 = por %p184, %p185
      %s187 = ssub.s32 %s27, %s34
      %p188 = scmp.eq.s32.totalorder %s187, 0
      %s190 = sadd.s32 %s189, 1
      %s191 = scalar_select %p188, %s189, %s190
      %p194 = pneg %p188
      %p195 = scmp.eq.s32.totalorder %s27, 1
      %p196 = por %p194, %p195
      %p197 = scmp.ne.s32.totalorder %s189, %s192
      %p198 = scmp.eq.s32.totalorder %s27, 0
      %p199 = por %p197, %p198
      %p200 = scmp.ne.s32.totalorder %s189, %s192
      %p201 = scmp.eq.s32.totalorder %s32, 1
      %p202 = por %p200, %p201
      %p203 = scmp.ne.s32.totalorder %s192, %s193
      %p204 = scmp.eq.s32.totalorder %s32, 0
      %p205 = por %p203, %p204
      %p206 = scmp.ne.s32.totalorder %s192, %s193
      %p207 = scmp.eq.s32.totalorder %s33, 1
      %p208 = por %p206, %p207
      %p210 = scmp.ne.s32.totalorder %s193, %s209
      %p211 = scmp.eq.s32.totalorder %s33, 0
      %p212 = por %p210, %p211
      %s213 = ssub.s32 %s27, %s34
      %p214 = scmp.eq.s32.totalorder %s213, 0
      %s216 = sadd.s32 %s215, 1
      %s217 = scalar_select %p214, %s215, %s216
      %p220 = pneg %p214
      %p221 = scmp.eq.s32.totalorder %s27, 1
      %p222 = por %p220, %p221
      %p223 = scmp.ne.s32.totalorder %s215, %s218
      %p224 = scmp.eq.s32.totalorder %s27, 0
      %p225 = por %p223, %p224
      %p226 = scmp.ne.s32.totalorder %s215, %s218
      %p227 = scmp.eq.s32.totalorder %s32, 1
      %p228 = por %p226, %p227
      %p229 = scmp.ne.s32.totalorder %s218, %s219
      %p230 = scmp.eq.s32.totalorder %s32, 0
      %p231 = por %p229, %p230
      %p232 = scmp.ne.s32.totalorder %s218, %s219
      %p233 = scmp.eq.s32.totalorder %s33, 1
      %p234 = por %p232, %p233
      %p236 = scmp.ne.s32.totalorder %s219, %s235
      %p237 = scmp.eq.s32.totalorder %s33, 0
      %p238 = por %p236, %p237
      %s239 = ssub.s32 %s27, %s34
      %p240 = scmp.eq.s32.totalorder %s239, 0
      %s242 = sadd.s32 %s241, 1
      %s243 = scalar_select %p240, %s241, %s242
      %p246 = pneg %p240
      %p247 = scmp.eq.s32.totalorder %s27, 1
      %p248 = por %p246, %p247
      %p249 = scmp.ne.s32.totalorder %s241, %s244
      %p250 = scmp.eq.s32.totalorder %s27, 0
      %p251 = por %p249, %p250
      %p252 = scmp.ne.s32.totalorder %s241, %s244
      %p253 = scmp.eq.s32.totalorder %s32, 1
      %p254 = por %p252, %p253
      %p255 = scmp.ne.s32.totalorder %s244, %s245
      %p256 = scmp.eq.s32.totalorder %s32, 0
      %p257 = por %p255, %p256
      %p258 = scmp.ne.s32.totalorder %s244, %s245
      %p259 = scmp.eq.s32.totalorder %s33, 1
      %p260 = por %p258, %p259
      %p262 = scmp.ne.s32.totalorder %s245, %s261
      %p263 = scmp.eq.s32.totalorder %s33, 0
      %p264 = por %p262, %p263
      %p265 = scmp.le.s32.totalorder 1, %s27
      %p266 = scmp.lt.s32.totalorder %s27, 3
      %p267 = pnand %p265, %p266
      %p268 = pneg %p267
      // Predicated region
      $region9: #{tpu_custom_call.1} parent=5 // pred_check
        _
      $region10: #{tpu_custom_call.1} parent=5 // pred_check_branch
        %270 = sbr.rel (%p267) target = $region12
      $region11: #{tpu_custom_call.1} parent=5 // pred_region
        %s271 = ssub.s32 %s27, 1
        // Predicated region
        $region13: #{tpu_custom_call.1} parent=11 // pred_check
          %p272 = pneg %p74
        $region14: #{tpu_custom_call.1} parent=11 // pred_check_branch
          %274 = sbr.rel (%p272) target = $region16
        $region15: #{tpu_custom_call.1} parent=11 // pred_region
          %276 = vsyncadd [#allocation6], 0
          %s277 = sshll.u32 %s1, 4
          %s278 = int_to_ptr.hbm [resolvable:$true] %s277
          %s279 = sshll.u32 [#allocation5], 4
          %s280 = int_to_ptr.vmem [resolvable:$true] %s279
          %285 = dma.hbm_to_vmem [thread:$0]  %s278, 2048, %s280, [#allocation6], 128, 128, 8
        $region16: #{tpu_custom_call.1} parent=11 // pred_fallthru
          _
        // Predicated region
        $region17: #{tpu_custom_call.1} parent=11 // pred_check
          %p286 = pneg %p95
        $region18: #{tpu_custom_call.1} parent=11 // pred_check_branch
          %288 = sbr.rel (%p286) target = $region20
        $region19: #{tpu_custom_call.1} parent=11 // pred_region
          _
        $region20: #{tpu_custom_call.1} parent=11 // pred_fallthru
          _
        // Predicated region
        $region21: #{tpu_custom_call.1} parent=11 // pred_check
          %p289 = pneg %p116
        $region22: #{tpu_custom_call.1} parent=11 // pred_check_branch
          %291 = sbr.rel (%p289) target = $region24
        $region23: #{tpu_custom_call.1} parent=11 // pred_region
          %293 = vsyncadd [#allocation6], 0
          %s294 = sshll.u32 %s3, 4
          %s295 = int_to_ptr.hbm [resolvable:$true] %s294
          %s296 = sshll.u32 [#allocation7], 4
          %s297 = int_to_ptr.vmem [resolvable:$true] %s296
          %302 = dma.hbm_to_vmem [thread:$0]  %s295, 2048, %s297, [#allocation6], 128, 128, 8
        $region24: #{tpu_custom_call.1} parent=11 // pred_fallthru
          _
        // Predicated region
        $region25: #{tpu_custom_call.1} parent=11 // pred_check
          %p303 = pneg %p137
        $region26: #{tpu_custom_call.1} parent=11 // pred_check_branch
          %305 = sbr.rel (%p303) target = $region28
        $region27: #{tpu_custom_call.1} parent=11 // pred_region
          _
        $region28: #{tpu_custom_call.1} parent=11 // pred_fallthru
          _
        // Predicated region
        $region29: #{tpu_custom_call.1} parent=11 // pred_check
          %p306 = pneg %p158
        $region30: #{tpu_custom_call.1} parent=11 // pred_check_branch
          %308 = sbr.rel (%p306) target = $region32
        $region31: #{tpu_custom_call.1} parent=11 // pred_region
          %310 = vsyncadd [#allocation9], 0
          %s311 = sshll.u32 %s5, 4
          %s312 = int_to_ptr.hbm [resolvable:$true] %s311
          %s313 = sshll.u32 [#allocation8], 4
          %s314 = int_to_ptr.vmem [resolvable:$true] %s313
          %319 = dma.hbm_to_vmem [thread:$0]  %s312, 2048, %s314, [#allocation9], 128, 128, 8
        $region32: #{tpu_custom_call.1} parent=11 // pred_fallthru
          _
        // Predicated region
        $region33: #{tpu_custom_call.1} parent=11 // pred_check
          %p320 = pneg %p179
        $region34: #{tpu_custom_call.1} parent=11 // pred_check_branch
          %322 = sbr.rel (%p320) target = $region36
        $region35: #{tpu_custom_call.1} parent=11 // pred_region
          _
        $region36: #{tpu_custom_call.1} parent=11 // pred_fallthru
          _
      $region12: #{tpu_custom_call.1} parent=5 // pred_fallthru
        _
      %p323 = scmp.lt.s32.totalorder %s27, 2
      // Predicated region
      $region37: #{tpu_custom_call.1} parent=5 // pred_check
        %p324 = pneg %p323
      $region38: #{tpu_custom_call.1} parent=5 // pred_check_branch
        %326 = sbr.rel (%p324) target = $region40
      $region39: #{tpu_custom_call.1} parent=5 // pred_region
        // Predicated region
        $region41: #{tpu_custom_call.1} parent=39 // pred_check
          %p327 = pneg %p47
        $region42: #{tpu_custom_call.1} parent=39 // pred_check_branch
          %329 = sbr.rel (%p327) target = $region44
        $region43: #{tpu_custom_call.1} parent=39 // pred_region
          %s330 = sand.u32 %s37, 1
          %s331 = scalar_lea.sflag [#allocation3], %s330
          %s332 = sand.u32 %s37, 1
          %s333 = smul.addr %s332, 8
          %s334 = scalar_lea.vmem [#allocation2], %s333
          %336 = vsyncadd %s331, 0
          %s337 = smul.addr %s27, 8
          %s338 = scalar_lea.hbm %s0, %s337
          %s340 = sshll.u32 %s338, 4
          %s341 = int_to_ptr.hbm [resolvable:$true] %s340
          %s342 = sshll.u32 %s334, 4
          %s343 = int_to_ptr.vmem [resolvable:$true] %s342
          %345 = dma.hbm_to_vmem [thread:$0]  %s341, 128, %s343, %s331
        $region44: #{tpu_custom_call.1} parent=39 // pred_fallthru
          _
      $region40: #{tpu_custom_call.1} parent=5 // pred_fallthru
        _
      %p346 = scmp.le.s32.totalorder 1, %s27
      %p347 = scmp.lt.s32.totalorder %s27, 3
      %p348 = pnand %p346, %p347
      %p349 = pneg %p348
      // Predicated region
      $region45: #{tpu_custom_call.1} parent=5 // pred_check
        _
      $region46: #{tpu_custom_call.1} parent=5 // pred_check_branch
        %351 = sbr.rel (%p348) target = $region48
      $region47: #{tpu_custom_call.1} parent=5 // pred_region
        %s352 = ssub.s32 %s27, 1
        %s353 = sand.u32 %s40, 1
        %s354 = scalar_lea.sflag [#allocation3], %s353
        %s355 = sand.u32 %s40, 1
        %s356 = smul.addr %s355, 8
        %s357 = scalar_lea.vmem [#allocation2], %s356
        // Predicated region
        $region49: #{tpu_custom_call.1} parent=47 // pred_check
          %p358 = pneg %p53
        $region50: #{tpu_custom_call.1} parent=47 // pred_check_branch
          %360 = sbr.rel (%p358) target = $region52
        $region51: #{tpu_custom_call.1} parent=47 // pred_region
          %362 = dma.done %s354, 128
        $region52: #{tpu_custom_call.1} parent=47 // pred_fallthru
          _
        // Predicated region
        $region53: #{tpu_custom_call.1} parent=47 // pred_check
          %p363 = pneg %p74
        $region54: #{tpu_custom_call.1} parent=47 // pred_check_branch
          %365 = sbr.rel (%p363) target = $region56
        $region55: #{tpu_custom_call.1} parent=47 // pred_region
          %367 = dma.done [#allocation6], 2048
        $region56: #{tpu_custom_call.1} parent=47 // pred_fallthru
          _
        // Predicated region
        $region57: #{tpu_custom_call.1} parent=47 // pred_check
          %p368 = pneg %p116
        $region58: #{tpu_custom_call.1} parent=47 // pred_check_branch
          %370 = sbr.rel (%p368) target = $region60
        $region59: #{tpu_custom_call.1} parent=47 // pred_region
          %372 = dma.done [#allocation6], 2048
        $region60: #{tpu_custom_call.1} parent=47 // pred_fallthru
          _
        // Predicated region
        $region61: #{tpu_custom_call.1} parent=47 // pred_check
          %p373 = pneg %p158
        $region62: #{tpu_custom_call.1} parent=47 // pred_check_branch
          %375 = sbr.rel (%p373) target = $region64
        $region63: #{tpu_custom_call.1} parent=47 // pred_region
          %377 = dma.done [#allocation9], 2048
        $region64: #{tpu_custom_call.1} parent=47 // pred_fallthru
          _
        %s378 = sand.u32 %s40, 1
        %s379 = scalar_lea.sflag [#allocation3], %s378
        %s380 = sand.u32 %s40, 1
        %s381 = smul.addr %s380, 8
        %s382 = scalar_lea.vmem [#allocation2], %s381
        %p383 = pneg %p53
        %p384 = pneg %p50
        %p385 = pneg %p74
        %p386 = pneg %p71
        %p387 = pneg %p95
        %p388 = pneg %p92
        %p389 = pneg %p116
        %p390 = pneg %p113
        %p391 = pneg %p137
        %p392 = pneg %p134
        %p393 = pneg %p158
        %p394 = pneg %p155
        %p395 = pneg %p179
        %p396 = pneg %p176
        %p397 = pneg %p205
        %p398 = pneg %p202
        %s399 = sand.u32 %s192, 1
        %s400 = scalar_lea.sflag [#allocation4], %s399
        %s401 = sand.u32 %s192, 1
        %s402 = smul.addr %s401, 8
        %s403 = scalar_lea.vmem [#allocation10], %s402
        %p404 = pneg %p231
        %p405 = pneg %p228
        %s406 = sand.u32 %s32, 1
        %s407 = scalar_lea.sflag [#allocation12], %s406
        %s408 = sand.u32 %s218, 1
        %s409 = smul.addr %s408, 8
        %s410 = scalar_lea.vmem [#allocation11], %s409
        %p411 = pneg %p257
        %p412 = pneg %p254
        %s413 = sand.u32 %s32, 1
        %s414 = scalar_lea.sflag [#allocation12], %s413
        %s415 = sand.u32 %s244, 1
        %s416 = smul.addr %s415, 8
        %s417 = scalar_lea.vmem [#allocation13], %s416
        %v418 = vld [vmem:[%s357] sm:$0xff]
        %v419 = vld [vmem:[#allocation5] sm:$0xff]
        %v420 = vld [vmem:[#allocation5 + $0x8] sm:$0xff]
        %v421 = vld [vmem:[#allocation5 + $0x10] sm:$0xff]
        %v422 = vld [vmem:[#allocation5 + $0x18] sm:$0xff]
        %v423 = vld [vmem:[#allocation5 + $0x20] sm:$0xff]
        %v424 = vld [vmem:[#allocation5 + $0x28] sm:$0xff]
        %v425 = vld [vmem:[#allocation5 + $0x30] sm:$0xff]
        %v426 = vld [vmem:[#allocation5 + $0x38] sm:$0xff]
        %v427 = vld [vmem:[#allocation5 + $0x40] sm:$0xff]
        %v428 = vld [vmem:[#allocation5 + $0x48] sm:$0xff]
        %v429 = vld [vmem:[#allocation5 + $0x50] sm:$0xff]
        %v430 = vld [vmem:[#allocation5 + $0x58] sm:$0xff]
        %v431 = vld [vmem:[#allocation5 + $0x60] sm:$0xff]
        %v432 = vld [vmem:[#allocation5 + $0x68] sm:$0xff]
        %v433 = vld [vmem:[#allocation5 + $0x70] sm:$0xff]
        %v434 = vld [vmem:[#allocation5 + $0x78] sm:$0xff]
        %v435 = vld [vmem:[%s2] sm:$0x1]
        %v437 = vperm.slane %v435, 0
        %439 = vmatpush.msra.mxu0 %v434
        %440 = vmatpush.msra.mxu0 %v433
        %441 = vmatpush.msra.mxu0 %v432
        %442 = vmatpush.msra.mxu0 %v431
        %443 = vmatpush.msra.mxu0 %v430
        %444 = vmatpush.msra.mxu0 %v429
        %445 = vmatpush.msra.mxu0 %v428
        %446 = vmatpush.msra.mxu0 %v427
        %447 = vmatpush.msra.mxu0 %v426
        %448 = vmatpush.msra.mxu0 %v425
        %449 = vmatpush.msra.mxu0 %v424
        %450 = vmatpush.msra.mxu0 %v423
        %451 = vmatpush.msra.mxu0 %v422
        %452 = vmatpush.msra.mxu0 %v421
        %453 = vmatpush.msra.mxu0 %v420
        %454 = vmatpush.msra.mxu0 %v419
        %455 = vmatmul.f32.gmra.mxu0 %v418
        %v456 = vpop.f32.mrf.mxu0
        %v457 = vadd.f32 %v437, %v456
        %458 = vdwg.mxu0
        %v459 = vmax.f32 %v457, 0.0
        %460 = vst [vmem:[%s403] sm:$0xff] %v459
        %v461 = vld [vmem:[#allocation7] sm:$0xff]
        %v462 = vld [vmem:[#allocation7 + $0x8] sm:$0xff]
        %v463 = vld [vmem:[#allocation7 + $0x10] sm:$0xff]
        %v464 = vld [vmem:[#allocation7 + $0x18] sm:$0xff]
        %v465 = vld [vmem:[#allocation7 + $0x20] sm:$0xff]
        %v466 = vld [vmem:[#allocation7 + $0x28] sm:$0xff]
        %v467 = vld [vmem:[#allocation7 + $0x30] sm:$0xff]
        %v468 = vld [vmem:[#allocation7 + $0x38] sm:$0xff]
        %v469 = vld [vmem:[#allocation7 + $0x40] sm:$0xff]
        %v470 = vld [vmem:[#allocation7 + $0x48] sm:$0xff]
        %v471 = vld [vmem:[#allocation7 + $0x50] sm:$0xff]
        %v472 = vld [vmem:[#allocation7 + $0x58] sm:$0xff]
        %v473 = vld [vmem:[#allocation7 + $0x60] sm:$0xff]
        %v474 = vld [vmem:[#allocation7 + $0x68] sm:$0xff]
        %v475 = vld [vmem:[#allocation7 + $0x70] sm:$0xff]
        %v476 = vld [vmem:[#allocation7 + $0x78] sm:$0xff]
        %v477 = vld [vmem:[%s4] sm:$0x1]
        %v479 = vperm.slane %v477, 0
        %481 = vmatpush.msra.mxu0 %v476
        %482 = vmatpush.msra.mxu0 %v475
        %483 = vmatpush.msra.mxu0 %v474
        %484 = vmatpush.msra.mxu0 %v473
        %485 = vmatpush.msra.mxu0 %v472
        %486 = vmatpush.msra.mxu0 %v471
        %487 = vmatpush.msra.mxu0 %v470
        %488 = vmatpush.msra.mxu0 %v469
        %489 = vmatpush.msra.mxu0 %v468
        %490 = vmatpush.msra.mxu0 %v467
        %491 = vmatpush.msra.mxu0 %v466
        %492 = vmatpush.msra.mxu0 %v465
        %493 = vmatpush.msra.mxu0 %v464
        %494 = vmatpush.msra.mxu0 %v463
        %495 = vmatpush.msra.mxu0 %v462
        %496 = vmatpush.msra.mxu0 %v461
        %497 = vmatmul.f32.gmra.mxu0 %v459
        %v498 = vpop.f32.mrf.mxu0
        %v499 = vadd.f32 %v479, %v498
        %500 = vdwg.mxu0
        %v501 = vmax.f32 %v499, 0.0
        %502 = vst [vmem:[%s410] sm:$0xff] %v501
        %v503 = vld [vmem:[#allocation8] sm:$0xff]
        %v504 = vld [vmem:[#allocation8 + $0x8] sm:$0xff]
        %v505 = vld [vmem:[#allocation8 + $0x10] sm:$0xff]
        %v506 = vld [vmem:[#allocation8 + $0x18] sm:$0xff]
        %v507 = vld [vmem:[#allocation8 + $0x20] sm:$0xff]
        %v508 = vld [vmem:[#allocation8 + $0x28] sm:$0xff]
        %v509 = vld [vmem:[#allocation8 + $0x30] sm:$0xff]
        %v510 = vld [vmem:[#allocation8 + $0x38] sm:$0xff]
        %v511 = vld [vmem:[#allocation8 + $0x40] sm:$0xff]
        %v512 = vld [vmem:[#allocation8 + $0x48] sm:$0xff]
        %v513 = vld [vmem:[#allocation8 + $0x50] sm:$0xff]
        %v514 = vld [vmem:[#allocation8 + $0x58] sm:$0xff]
        %v515 = vld [vmem:[#allocation8 + $0x60] sm:$0xff]
        %v516 = vld [vmem:[#allocation8 + $0x68] sm:$0xff]
        %v517 = vld [vmem:[#allocation8 + $0x70] sm:$0xff]
        %v518 = vld [vmem:[#allocation8 + $0x78] sm:$0xff]
        %v519 = vld [vmem:[%s6] sm:$0x1]
        %v521 = vperm.slane %v519, 0
        %523 = vmatpush.msra.mxu0 %v518
        %524 = vmatpush.msra.mxu0 %v517
        %525 = vmatpush.msra.mxu0 %v516
        %526 = vmatpush.msra.mxu0 %v515
        %527 = vmatpush.msra.mxu0 %v514
        %528 = vmatpush.msra.mxu0 %v513
        %529 = vmatpush.msra.mxu0 %v512
        %530 = vmatpush.msra.mxu0 %v511
        %531 = vmatpush.msra.mxu0 %v510
        %532 = vmatpush.msra.mxu0 %v509
        %533 = vmatpush.msra.mxu0 %v508
        %534 = vmatpush.msra.mxu0 %v507
        %535 = vmatpush.msra.mxu0 %v506
        %536 = vmatpush.msra.mxu0 %v505
        %537 = vmatpush.msra.mxu0 %v504
        %538 = vmatpush.msra.mxu0 %v503
        %539 = vmatmul.f32.gmra.mxu0 %v501
        %v540 = vpop.f32.mrf.mxu0
        %v541 = vadd.f32 %v521, %v540
        %542 = vdwg.mxu0
        %543 = vst [vmem:[%s417] sm:$0xff] %v541
        %s544 = sand.u32 %s192, 1
        %s545 = scalar_lea.sflag [#allocation4], %s544
        %s546 = sand.u32 %s192, 1
        %s547 = smul.addr %s546, 8
        %s548 = scalar_lea.vmem [#allocation10], %s547
        %s549 = sand.u32 %s32, 1
        %s550 = scalar_lea.sflag [#allocation12], %s549
        %s551 = sand.u32 %s218, 1
        %s552 = smul.addr %s551, 8
        %s553 = scalar_lea.vmem [#allocation11], %s552
        %s554 = sand.u32 %s32, 1
        %s555 = scalar_lea.sflag [#allocation12], %s554
        %s556 = sand.u32 %s244, 1
        %s557 = smul.addr %s556, 8
        %s558 = scalar_lea.vmem [#allocation13], %s557
        // Predicated region
        $region65: #{tpu_custom_call.1} parent=47 // pred_check
          %p559 = pneg %p202
        $region66: #{tpu_custom_call.1} parent=47 // pred_check_branch
          %561 = sbr.rel (%p559) target = $region68
        $region67: #{tpu_custom_call.1} parent=47 // pred_region
          %563 = vsyncadd %s545, 0
          %s564 = smul.addr %s32, 8
          %s565 = scalar_lea.hbm %s7, %s564
          %s567 = sshll.u32 %s548, 4
          %s568 = int_to_ptr.vmem [resolvable:$true] %s567
          %s569 = sshll.u32 %s565, 4
          %s570 = int_to_ptr.hbm [resolvable:$true] %s569
          %572 = dma.vmem_to_hbm [thread:$0]  %s568, 128, %s570, %s545
        $region68: #{tpu_custom_call.1} parent=47 // pred_fallthru
          _
        // Predicated region
        $region69: #{tpu_custom_call.1} parent=47 // pred_check
          %p573 = pneg %p228
        $region70: #{tpu_custom_call.1} parent=47 // pred_check_branch
          %575 = sbr.rel (%p573) target = $region72
        $region71: #{tpu_custom_call.1} parent=47 // pred_region
          %577 = vsyncadd %s550, 0
          %s578 = smul.addr %s32, 8
          %s579 = scalar_lea.hbm %s8, %s578
          %s581 = sshll.u32 %s553, 4
          %s582 = int_to_ptr.vmem [resolvable:$true] %s581
          %s583 = sshll.u32 %s579, 4
          %s584 = int_to_ptr.hbm [resolvable:$true] %s583
          %586 = dma.vmem_to_hbm [thread:$0]  %s582, 128, %s584, %s550
        $region72: #{tpu_custom_call.1} parent=47 // pred_fallthru
          _
        // Predicated region
        $region73: #{tpu_custom_call.1} parent=47 // pred_check
          %p587 = pneg %p254
        $region74: #{tpu_custom_call.1} parent=47 // pred_check_branch
          %589 = sbr.rel (%p587) target = $region76
        $region75: #{tpu_custom_call.1} parent=47 // pred_region
          %591 = vsyncadd %s555, 0
          %s592 = smul.addr %s32, 8
          %s593 = scalar_lea.hbm %s9, %s592
          %s595 = sshll.u32 %s558, 4
          %s596 = int_to_ptr.vmem [resolvable:$true] %s595
          %s597 = sshll.u32 %s593, 4
          %s598 = int_to_ptr.hbm [resolvable:$true] %s597
          %600 = dma.vmem_to_hbm [thread:$0]  %s596, 128, %s598, %s555
        $region76: #{tpu_custom_call.1} parent=47 // pred_fallthru
          _
      $region48: #{tpu_custom_call.1} parent=5 // pred_fallthru
        _
      %p601 = scmp.le.s32.totalorder 2, %s27
      // Predicated region
      $region77: #{tpu_custom_call.1} parent=5 // pred_check
        %p602 = pneg %p601
      $region78: #{tpu_custom_call.1} parent=5 // pred_check_branch
        %604 = sbr.rel (%p602) target = $region80
      $region79: #{tpu_custom_call.1} parent=5 // pred_region
        %s605 = ssub.s32 %s27, 2
        // Predicated region
        $region81: #{tpu_custom_call.1} parent=79 // pred_check
          %p606 = pneg %p208
        $region82: #{tpu_custom_call.1} parent=79 // pred_check_branch
          %608 = sbr.rel (%p606) target = $region84
        $region83: #{tpu_custom_call.1} parent=79 // pred_region
          %s609 = sand.u32 %s193, 1
          %s610 = scalar_lea.sflag [#allocation4], %s609
          %s611 = sand.u32 %s193, 1
          %s612 = smul.addr %s611, 8
          %s613 = scalar_lea.vmem [#allocation10], %s612
          %615 = dma.done %s610, 128
        $region84: #{tpu_custom_call.1} parent=79 // pred_fallthru
          _
        // Predicated region
        $region85: #{tpu_custom_call.1} parent=79 // pred_check
          %p616 = pneg %p234
        $region86: #{tpu_custom_call.1} parent=79 // pred_check_branch
          %618 = sbr.rel (%p616) target = $region88
        $region87: #{tpu_custom_call.1} parent=79 // pred_region
          %s619 = sand.u32 %s33, 1
          %s620 = scalar_lea.sflag [#allocation12], %s619
          %s621 = sand.u32 %s219, 1
          %s622 = smul.addr %s621, 8
          %s623 = scalar_lea.vmem [#allocation11], %s622
          %625 = dma.done %s620, 128
        $region88: #{tpu_custom_call.1} parent=79 // pred_fallthru
          _
        // Predicated region
        $region89: #{tpu_custom_call.1} parent=79 // pred_check
          %p626 = pneg %p260
        $region90: #{tpu_custom_call.1} parent=79 // pred_check_branch
          %628 = sbr.rel (%p626) target = $region92
        $region91: #{tpu_custom_call.1} parent=79 // pred_region
          %s629 = sand.u32 %s33, 1
          %s630 = scalar_lea.sflag [#allocation12], %s629
          %s631 = sand.u32 %s245, 1
          %s632 = smul.addr %s631, 8
          %s633 = scalar_lea.vmem [#allocation13], %s632
          %635 = dma.done %s630, 128
        $region92: #{tpu_custom_call.1} parent=79 // pred_fallthru
          _
      $region80: #{tpu_custom_call.1} parent=5 // pred_fallthru
        _
    $region6: #{tpu_custom_call.1} parent=1 // loop_footer
      %s31 = sadd.s32 1, %s27
    $region7: #{tpu_custom_call.1} parent=1 // loop_footer_branch
      %26 = sbr.rel target = $region3
    $region8: #{tpu_custom_call.1} parent=1 // loop_exit
      _
    %636 = vsyncpa [#allocation3], 1
    %s637 = scalar_lea.sflag [#allocation3], 1
    %638 = vsyncpa %s637, 1
    %639 = vsyncpa [#allocation6], 1
    %640 = vsyncpa [#allocation9], 1
    %641 = vsyncpa [#allocation4], 1
    %s642 = scalar_lea.sflag [#allocation4], 1
    %643 = vsyncpa %s642, 1
    %644 = vsyncpa [#allocation12], 1
    %s645 = scalar_lea.sflag [#allocation12], 1
    %646 = vsyncpa %s645, 1

</llo_original>
